<compile_context>
chip_gen: v7x
topology: tpu7x:2x2x1
jax: 0.10.0
libtpu: 0.0.40
codegen_flags: <defaults>
</compile_context>

<pallas_src>
import math
import functools

import jax
import jax.numpy as jnp
from jax import lax
from jax.experimental import pallas as pl
from jax.experimental.pallas import tpu as pltpu


# --------------------------------------------------------------------------
# helpers
# --------------------------------------------------------------------------
def _round_up(x, m):
    return ((x + m - 1) // m) * m


def _physical_vmem_bytes():
    try:
        cap = getattr(pltpu.get_tpu_info(), "vmem_capacity_bytes", None)
        if cap:
            return int(cap)
    except Exception:
        pass
    return 64 * 2**20                         # conservative (v7x per-TC)


def _vmem_limit_bytes(nbytes):
    """Scoped-VMEM budget capped at the physical per-core VMEM of the chip."""
    cap = _physical_vmem_bytes()
    if cap >= 128 * 2**20:                    # v5e / v6e (128 MiB physical)
        hi = 96 * 2**20
    else:                                     # v7x: 64 MiB, leave headroom
        hi = max(cap - 16 * 2**20, 32 * 2**20)
    lo = min(32 * 2**20, hi)
    return int(min(max(2 * int(nbytes), lo), hi))


# --------------------------------------------------------------------------
# Kernel 1: fused corr_volume + pos_embed with ONLINE softmax over source tiles
#   corr[i, j] = sum_c f0[c, i] * f1[c, j] / sqrt(C)      (bf16 MXU, f32 acc)
#   P = softmax_j(corr)  (running max / sum carried in VMEM scratch over the
#                         "arbitrary" grid axis of source chunks)
#   flow[i, d] = sum_j P[i, j] * grid[j, d]               (fused accumulation)
# --------------------------------------------------------------------------
def _corr_posembed_kernel(f0_ref, f1_ref, gridT_ref, o_ref,
                          m_scr, l_scr, acc_scr,
                          *, inv_sqrt_c, n1_valid, tk1, n1_padded):
    k = pl.program_id(2)

    @pl.when(k == 0)
    def _():
        m_scr[...] = jnp.full_like(m_scr, -jnp.inf)
        l_scr[...] = jnp.zeros_like(l_scr)
        acc_scr[...] = jnp.zeros_like(acc_scr)

    # fold 1/sqrt(C) onto the small (C, tn0) operand (saves a (tn0, tk1) pass)
    a = f0_ref[0] * inv_sqrt_c                                      # (C, tn0) bf16
    b = f1_ref[0]                                                   # (C, tk1) bf16
    # contract dim 0 of both operands: MXU consumes stored layouts, no transposes
    corr = lax.dot_general(a, b, (((0,), (0,)), ((), ())),
                           preferred_element_type=jnp.float32)      # (tn0, tk1)
    if n1_padded:
        col = k * tk1 + lax.broadcasted_iota(jnp.int32, corr.shape, 1)
        corr = jnp.where(col < n1_valid, corr, -1e30)

    m_prev = m_scr[...]                                             # (tn0, 1)
    m_new = jnp.maximum(m_prev, jnp.max(corr, axis=-1, keepdims=True))
    alpha = jnp.exp(m_prev - m_new)
    p = jnp.exp(corr - m_new)                                       # (tn0, tk1)
    l_scr[...] = alpha * l_scr[...] + jnp.sum(p, axis=-1, keepdims=True)
    # pos-embed contribution (tn0, 2): keep f32 (grid coords stay exact); the
    # padded-N MXU work rides under the EUP-bound softmax.
    contrib = lax.dot_general(p, gridT_ref[...], (((1,), (1,)), ((), ())),
                              preferred_element_type=jnp.float32)
    acc_scr[...] = alpha * acc_scr[...] + contrib
    m_scr[...] = m_new

    @pl.when(k == pl.num_programs(2) - 1)
    def _():
        # exact division (over only (tn0, 2)) — negligible cost, exact softmax
        o_ref[0] = acc_scr[...] / l_scr[...]


def corr_pos_embed(f0, f1):
    """f0, f1: (B, C, H, W) float32 (NCHW). Returns flow (B, 2, H0, W0)."""
    B, C, H0, W0 = f0.shape
    _, _, H1, W1 = f1.shape
    N0, N1 = H0 * W0, H1 * W1

    # robust tiling: pad both flattened spatial axes to lane multiples
    Np0 = _round_up(N0, 128)
    tn0 = 256 if Np0 % 256 == 0 else 128
    tk1 = min(512, _round_up(N1, 128))
    Np1 = _round_up(N1, tk1)

    f0f = f0.reshape(B, C, N0)
    f1f = f1.reshape(B, C, N1)
    if Np0 != N0:
        f0f = jnp.pad(f0f, ((0, 0), (0, 0), (0, Np0 - N0)))
    if Np1 != N1:
        f1f = jnp.pad(f1f, ((0, 0), (0, 0), (0, Np1 - N1)))
    # bf16 MXU operands (halves feature DMA too); accumulation stays f32
    f0f = f0f.astype(jnp.bfloat16)
    f1f = f1f.astype(jnp.bfloat16)

    xs = jnp.linspace(-1 + 1 / W1, 1 - 1 / W1, W1)
    ys = jnp.linspace(-1 + 1 / H1, 1 - 1 / H1, H1)
    X, Y = jnp.meshgrid(xs, ys, indexing="xy")                      # (H1, W1)
    gridT = jnp.stack((X.reshape(-1), Y.reshape(-1)), axis=0).astype(jnp.float32)
    if Np1 != N1:
        gridT = jnp.pad(gridT, ((0, 0), (0, Np1 - N1)))

    nt0 = Np0 // tn0
    nk1 = Np1 // tk1

    per_step = 2 * C * (tn0 + tk1) + 4 * 2 * tk1
    live = 3 * 4 * tn0 * tk1 + 4 * 4 * tn0 * 128
    need = 2 * per_step + live

    kern = functools.partial(_corr_posembed_kernel,
                             inv_sqrt_c=1.0 / math.sqrt(C),
                             n1_valid=N1, tk1=tk1, n1_padded=(Np1 != N1))
    out = pl.pallas_call(
        kern,
        out_shape=jax.ShapeDtypeStruct((B, Np0, 2), jnp.float32),
        grid_spec=pltpu.PrefetchScalarGridSpec(
            num_scalar_prefetch=0,
            grid=(B, nt0, nk1),
            in_specs=[
                pl.BlockSpec((1, C, tn0), lambda b, i, k: (b, 0, i)),
                pl.BlockSpec((1, C, tk1), lambda b, i, k: (b, 0, k)),
                pl.BlockSpec((2, tk1), lambda b, i, k: (0, k)),
            ],
            out_specs=pl.BlockSpec((1, tn0, 2), lambda b, i, k: (b, i, 0)),
            scratch_shapes=[pltpu.VMEM((tn0, 1), jnp.float32),
                            pltpu.VMEM((tn0, 1), jnp.float32),
                            pltpu.VMEM((tn0, 2), jnp.float32)],
        ),
        compiler_params=pltpu.CompilerParams(
            dimension_semantics=("parallel", "parallel", "arbitrary"),
            vmem_limit_bytes=_vmem_limit_bytes(need)),
    )(f0f, f1f, gridT)

    flow = jnp.transpose(out[:, :N0, :], (0, 2, 1)).reshape(B, 2, H0, W0)
    return flow


# --------------------------------------------------------------------------
# Kernel 2: ConvRefiner conv stack (9 blocks), batch folded into the lane axis
#   activation layout: (C, L) with L = B * Gh * Wh  (Gh = Wh = G + 2*pad halo)
#   per block: depthwise 5x5 via pltpu.roll + FMA (no selects, halo already 0),
#              bias + ReLU, 1x1 conv on the MXU (bf16 x bf16 -> f32),
#              halo re-zeroed with one multiply by a precomputed (1, L) mask.
#   block 0 builds the input (DMA gf/xh/disp from HBM into the scratch +
#   in-kernel disp-embedding 1x1); last block applies the f32 out_conv.
# --------------------------------------------------------------------------
def _refiner_kernel(gf_hbm, xh_hbm, dsp_hbm, mask_ref, dew_ref, deb_ref,
                    wdw_ref, bdw_ref, wpw_ref, bpw_ref, wout_ref, bout_ref,
                    o_ref, x_scr, dsp_scr, sem,
                    *, n_blocks, ksize, wh, cf, demb):
    blk = pl.program_id(0)
    C, L = x_scr.shape
    pad = ksize // 2
    mask = mask_ref[...]                                            # (1, L)

    # --- block 0: build d = [grid_feature; x_hat; disp_emb] in the scratch
    @pl.when(blk == 0)
    def _():
        c0 = pltpu.make_async_copy(gf_hbm, x_scr.at[pl.ds(0, cf)], sem.at[0])
        c1 = pltpu.make_async_copy(xh_hbm, x_scr.at[pl.ds(cf, cf)], sem.at[1])
        c2 = pltpu.make_async_copy(dsp_hbm, dsp_scr, sem.at[2])
        c0.start(); c1.start(); c2.start()
        c0.wait(); c1.wait(); c2.wait()
        dsp = dsp_scr[...]                                          # (2, L)
        dew = dew_ref[...]                                          # (D, 2)
        emb = (dew[:, 0:1] * dsp[0:1, :] + dew[:, 1:2] * dsp[1:2, :]
               + deb_ref[...])                                      # (D, L)
        # bias makes the halo nonzero -> zero it before the first depthwise
        x_scr[2 * cf:2 * cf + demb, :] = emb * mask

    x = x_scr[...]                                                  # (C, L)

    # --- depthwise ksize x ksize conv (BN folded): pure roll + FMA
    wdw = wdw_ref[0]                                                # (C, k*k)
    acc = jnp.zeros((C, L), jnp.float32)
    t = 0
    for dy in range(ksize):
        for dx in range(ksize):
            oy, ox = dy - pad, dx - pad
            shift = (-(oy * wh + ox)) % L
            src = x if shift == 0 else pltpu.roll(x, shift, axis=1)
            acc = acc + src * wdw[:, t:t + 1]
            t += 1
    acc = jnp.maximum(acc + bdw_ref[0], 0.0)        # folded bias+BN shift, ReLU

    # --- pointwise 1x1 conv on the MXU (bf16 weights pre-cast on host)
    y = jnp.dot(wpw_ref[0], acc.astype(jnp.bfloat16),
                preferred_element_type=jnp.float32) + bpw_ref[0]
    y = y * mask                                    # re-zero halo once per block
    x_scr[...] = y

    # --- out_conv (1x1, f32 — matches torch's `self.out_conv(d.float())`)
    @pl.when(blk == n_blocks - 1)
    def _():
        o_ref[...] = (jnp.dot(wout_ref[...], y,
                              preferred_element_type=jnp.float32)
                      + bout_ref[...]).astype(o_ref.dtype)


def refiner_stack(grid_feature, x_hat, disp_scaled, pp, G):
    """grid_feature / x_hat: (B, Cf, G, G); disp_scaled: (B, 2, G, G).
    Returns (B, out_dim, G, G) float32."""
    B, Cf, _, _ = grid_feature.shape
    NB, C, KK = pp["wdw"].shape
    ksize = int(round(math.sqrt(KK)))
    pad = ksize // 2
    Gh = G + 2 * pad
    out_dim = pp["wout"].shape[0]
    demb = pp["demb_w"].shape[0]
    assert C == 2 * Cf + demb

    Lraw = B * Gh * Gh
    Lp = _round_up(Lraw, 128)

    def fold(arr):                  # (B, c, G, G) -> (c, Lp) halo layout
        bb, cc = arr.shape[:2]
        ap = jnp.pad(arr, ((0, 0), (0, 0), (pad, pad), (pad, pad)))
        ap = ap.reshape(bb, cc, Gh * Gh).transpose(1, 0, 2).reshape(cc, Lraw)
        return jnp.pad(ap, ((0, 0), (0, Lp - Lraw)))

    gf = fold(grid_feature)                                         # (Cf, Lp)
    xh = fold(x_hat)                                                # (Cf, Lp)
    dsp = fold(disp_scaled)                                         # (2,  Lp)

    m2 = jnp.zeros((Gh, Gh), jnp.float32).at[pad:pad + G, pad:pad + G].set(1.0)
    mask = jnp.pad(jnp.tile(m2.reshape(-1), B), (0, Lp - Lraw)).reshape(1, Lp)

    need = (4 * Lp * (3 * C + 2 + 1 + out_dim)
            + 2 * (4 * C * KK + 2 * C * C + 8 * C)
            + 4 * out_dim * (C + 1))

    kern = functools.partial(_refiner_kernel, n_blocks=NB, ksize=ksize,
                             wh=Gh, cf=Cf, demb=demb)
    out = pl.pallas_call(
        kern,
        out_shape=jax.ShapeDtypeStruct((out_dim, Lp), jnp.float32),
        grid_spec=pltpu.PrefetchScalarGridSpec(
            num_scalar_prefetch=0,
            grid=(NB,),
            in_specs=[
                pl.BlockSpec(memory_space=pl.ANY),                  # gf  (HBM)
                pl.BlockSpec(memory_space=pl.ANY),                  # xh  (HBM)
                pl.BlockSpec(memory_space=pl.ANY),                  # dsp (HBM)
                pl.BlockSpec((1, Lp), lambda k: (0, 0)),            # halo mask
                pl.BlockSpec(pp["demb_w"].shape, lambda k: (0, 0)),
                pl.BlockSpec(pp["demb_b"].shape, lambda k: (0, 0)),
                pl.BlockSpec((1, C, KK), lambda k: (k, 0, 0)),
                pl.BlockSpec((1, C, 1), lambda k: (k, 0, 0)),
                pl.BlockSpec((1, C, C), lambda k: (k, 0, 0)),
                pl.BlockSpec((1, C, 1), lambda k: (k, 0, 0)),
                pl.BlockSpec(pp["wout"].shape, lambda k: (0, 0)),
                pl.BlockSpec(pp["bout"].shape, lambda k: (0, 0)),
            ],
            out_specs=pl.BlockSpec((out_dim, Lp), lambda k: (0, 0)),
            scratch_shapes=[pltpu.VMEM((C, Lp), jnp.float32),
                            pltpu.VMEM((2, Lp), jnp.float32),
                            pltpu.SemaphoreType.DMA((3,))],
        ),
        compiler_params=pltpu.CompilerParams(
            dimension_semantics=("arbitrary",),
            vmem_limit_bytes=_vmem_limit_bytes(need)),
    )(gf, xh, dsp, mask, pp["demb_w"], pp["demb_b"],
      pp["wdw"], pp["bdw"], pp["wpw"], pp["bpw"], pp["wout"], pp["bout"])

    out = out[:, :Lraw].reshape(out_dim, B, Gh, Gh)[:, :, pad:pad + G, pad:pad + G]
    return jnp.transpose(out, (1, 0, 2, 3))                         # (B, 3, G, G)


# --------------------------------------------------------------------------
# Host-side parameter prep: fold eval-mode BatchNorm into the depthwise conv,
# pre-cast the pointwise weights to bf16, channel-major layouts.
# --------------------------------------------------------------------------
def prep_refiner_params(p, eps=1e-5):
    scale = p["gamma"] / jnp.sqrt(p["var"] + eps)                   # (NB, C)
    shift = p["beta"] - p["mean"] * scale
    NB, k, _, C = p["wdw"].shape
    wdw = (p["wdw"] * scale[:, None, None, :]).transpose(0, 3, 1, 2)
    wdw = wdw.reshape(NB, C, k * k)
    bdw = (p["bdw"] * scale + shift)[:, :, None]                    # (NB, C, 1)
    return dict(
        wdw=wdw.astype(jnp.float32),
        bdw=bdw.astype(jnp.float32),
        wpw=p["wpw"].astype(jnp.bfloat16),                          # (NB, Cout, Cin)
        bpw=p["bpw"][:, :, None].astype(jnp.float32),               # (NB, C, 1)
        wout=p["wout"].astype(jnp.float32),                         # (out_dim, C)
        bout=p["bout"][:, None].astype(jnp.float32),                # (out_dim, 1)
        demb_w=p["disp_emb_w"].astype(jnp.float32),                 # (D, 2)
        demb_b=p["disp_emb_b"][:, None].astype(jnp.float32),        # (D, 1)
    )


# --------------------------------------------------------------------------
# JAX glue: grid_sample, ConvRefiner forward, GFNet multi-scale loop
# --------------------------------------------------------------------------
def grid_sample_bilinear(img, grid):
    """F.grid_sample(mode='bilinear', align_corners=False, padding_mode='zeros')."""
    B, C, H, W = img.shape
    x = (grid[..., 0] + 1.0) * (W * 0.5) - 0.5
    y = (grid[..., 1] + 1.0) * (H * 0.5) - 0.5
    x0 = jnp.floor(x)
    y0 = jnp.floor(y)
    x1 = x0 + 1.0
    y1 = y0 + 1.0
    wx1 = x - x0
    wx0 = 1.0 - wx1
    wy1 = y - y0
    wy0 = 1.0 - wy1
    flat = img.reshape(B, C, H * W)

    def gather(ix, iy):
        valid = (ix >= 0) & (ix <= W - 1) & (iy >= 0) & (iy <= H - 1)
        ixc = jnp.clip(ix, 0, W - 1).astype(jnp.int32)
        iyc = jnp.clip(iy, 0, H - 1).astype(jnp.int32)
        idx = (iyc * W + ixc).reshape(B, 1, -1)
        vals = jnp.take_along_axis(flat, idx, axis=2).reshape(B, C, *ix.shape[1:])
        return vals * valid[:, None].astype(img.dtype)

    return (gather(x0, y0) * (wx0 * wy0)[:, None]
            + gather(x1, y0) * (wx1 * wy0)[:, None]
            + gather(x0, y1) * (wx0 * wy1)[:, None]
            + gather(x1, y1) * (wx1 * wy1)[:, None])


def conv_refiner_apply(pp, num_grid, x, y, flow, scale_factor=1.0):
    """ConvRefiner.forward (corr_in_other=False path, displacement_emb='linear')."""
    b, cf, _, _ = x.shape
    G = num_grid
    x_hat = grid_sample_bilinear(y, jnp.transpose(flow, (0, 2, 3, 1)))
    lin = jnp.linspace(-1 + 1 / G, 1 - 1 / G, G).astype(jnp.float32)
    rr, cc = jnp.meshgrid(lin, lin, indexing="ij")
    im_A_coords = jnp.broadcast_to(jnp.stack((cc, rr))[None], (b, 2, G, G))
    grid_feature = grid_sample_bilinear(x, jnp.transpose(im_A_coords, (0, 2, 3, 1)))
    in_disp = flow - im_A_coords
    disp_scaled = (40.0 / 32.0) * scale_factor * in_disp
    out = refiner_stack(grid_feature, x_hat, disp_scaled, pp, G)    # (B, 3, G, G)
    return out[:, :2], out[:, 2:3], None


def gfnet_forward(features0, features1, refiner_params_raw, num_grid, num_itr,
                  H0, W0, scale_factor=1.0):
    scales = list(features0.keys())
    refiner_params = {s: prep_refiner_params(refiner_params_raw[s]) for s in scales}
    corresps = {}
    flow = None
    certainty = None
    for idx, scale in enumerate(scales):
        f0 = features0[scale]
        f1 = features1[scale]
        if idx == 0:
            flow = corr_pos_embed(f0, f1)                           # Pallas
            certainty = jnp.zeros_like(flow[:, :1])
        corresps[scale] = {}
        displacement_pre = jnp.zeros_like(flow) + 1e-7
        for itr in range(num_itr[idx]):
            delta_flow, delta_certainty, _ = conv_refiner_apply(
                refiner_params[scale], num_grid[idx], f0, f1, flow,
                scale_factor=scale_factor)
            displacement = int(scale) * jnp.stack(
                (delta_flow[:, 0].astype(jnp.float32) / (4 * W0),
                 delta_flow[:, 1].astype(jnp.float32) / (4 * H0)), axis=1)
            # eval-mode tiny-update zeroing, division-free (same semantics as
            # torch's |d - dp| / |dp| < 1e-6, without the 0/0 NaN)
            tiny = (jnp.abs(displacement - displacement_pre)
                    < 1e-6 * jnp.abs(displacement_pre))
            displacement = jnp.where(tiny, 0.0, displacement)
            flow = flow + displacement
            certainty = certainty + delta_certainty
            corresps[scale][itr + 1] = {"flow": flow, "certainty": certainty}
            displacement_pre = displacement
        if scale != scales[-1]:
            Gn = num_grid[idx + 1]
            B = flow.shape[0]
            flow = jax.image.resize(flow, (B, 2, Gn, Gn), method="bilinear")
            certainty = jax.image.resize(certainty, (B, 1, Gn, Gn), method="bilinear")
    return corresps


# --------------------------------------------------------------------------
# Deterministic parameter init (fresh-module semantics: BN gamma=1, beta=0,
# running_mean=0, running_var=1; torch-style (out, in) 1x1 conv ordering).
# --------------------------------------------------------------------------
def init_refiner_params(key, hidden_dim, disp_dim, out_dim=3, n_blocks_total=9,
                        ksize=5):
    ks = jax.random.split(key, 7)
    return dict(
        wdw=jax.random.normal(ks[0], (n_blocks_total, ksize, ksize, hidden_dim),
                              jnp.float32) * 0.05,
        bdw=jax.random.normal(ks[1], (n_blocks_total, hidden_dim), jnp.float32) * 0.01,
        gamma=jnp.ones((n_blocks_total, hidden_dim), jnp.float32),
        beta=jnp.zeros((n_blocks_total, hidden_dim), jnp.float32),
        mean=jnp.zeros((n_blocks_total, hidden_dim), jnp.float32),
        var=jnp.ones((n_blocks_total, hidden_dim), jnp.float32),
        wpw=jax.random.normal(ks[2], (n_blocks_total, hidden_dim, hidden_dim),
                              jnp.float32) * 0.05,
        bpw=jax.random.normal(ks[3], (n_blocks_total, hidden_dim), jnp.float32) * 0.01,
        wout=jax.random.normal(ks[4], (out_dim, hidden_dim), jnp.float32) * 0.05,
        bout=jax.random.normal(ks[5], (out_dim,), jnp.float32) * 0.01,
        disp_emb_w=jax.random.normal(ks[6], (disp_dim, 2), jnp.float32) * 0.1,
        disp_emb_b=jnp.zeros((disp_dim,), jnp.float32),
    )


if __name__ == "__main__":
    key = jax.random.PRNGKey(0)
    B = 2
    H0 = W0 = 64            # original "image" size (used for displacement scaling)
    feat_dim = 8            # per-scale feature channels (small synthetic pyramid)
    disp_dim = 4            # displacement embedding dim
    num_grid = [8, 16]      # grid size at each pyramid scale
    num_itr = [1, 1]        # refinement iterations per scale
    scales = ["16", "1"]

    k0, k1, k2, k3, kp16, kp1 = jax.random.split(key, 6)
    features0 = {
        "16": jax.random.normal(k0, (B, feat_dim, num_grid[0], num_grid[0]), jnp.float32),
        "1":  jax.random.normal(k1, (B, feat_dim, num_grid[1], num_grid[1]), jnp.float32),
    }
    features1 = {
        "16": jax.random.normal(k2, (B, feat_dim, num_grid[0], num_grid[0]), jnp.float32),
        "1":  jax.random.normal(k3, (B, feat_dim, num_grid[1], num_grid[1]), jnp.float32),
    }

    # ConvRefiner: in_dim == hidden_dim == 2*feat_dim + disp_dim (corr_in_other=False)
    hidden_dim = 2 * feat_dim + disp_dim
    refiner_params = {
        "16": init_refiner_params(kp16, hidden_dim, disp_dim, n_blocks_total=1 + 8, ksize=5),
        "1":  init_refiner_params(kp1, hidden_dim, disp_dim, n_blocks_total=1 + 8, ksize=5),
    }

    corresps = gfnet_forward(features0, features1, refiner_params, num_grid,
                             num_itr, H0, W0)

    final = corresps["1"][num_itr[-1]]
    jax.block_until_ready(final["flow"])
    jax.block_until_ready(final["certainty"])
    assert final["flow"].shape == (B, 2, num_grid[-1], num_grid[-1])
    assert final["certainty"].shape == (B, 1, num_grid[-1], num_grid[-1])
    assert bool(jnp.all(jnp.isfinite(final["flow"])))
    assert bool(jnp.all(jnp.isfinite(final["certainty"])))
    print("KERNEL_OK")
</pallas_src>

<mosaic_0001>
module attributes {stable_mosaic.version = 11 : i64} {
  func.func @_corr_posembed_kernel(%arg0: i32, %arg1: i32, %arg2: i32, %arg3: memref<1x8x128xbf16, #tpu.memory_space<vmem>>, %arg4: memref<1x8x128xbf16, #tpu.memory_space<vmem>>, %arg5: memref<2x128xf32, #tpu.memory_space<vmem>>, %arg6: memref<1x128x2xf32, #tpu.memory_space<vmem>>, %arg7: memref<128x1xf32, #tpu.memory_space<vmem>>, %arg8: memref<128x1xf32, #tpu.memory_space<vmem>>, %arg9: memref<128x2xf32, #tpu.memory_space<vmem>>) attributes {dimension_semantics = [#tpu.dimension_semantics<parallel>, #tpu.dimension_semantics<parallel>, #tpu.dimension_semantics<arbitrary>], iteration_bounds = array<i64: 2, 1, 1>, scalar_prefetch = 0 : i64, scratch_operands = 3 : i64, tpu.core_type = #tpu.core_type<tc>, window_params = [{transform_indices = @transform_0, window_bounds = array<i64: 1, 8, 128>}, {transform_indices = @transform_1, window_bounds = array<i64: 1, 8, 128>}, {transform_indices = @transform_2, window_bounds = array<i64: 2, 128>}, {transform_indices = @transform_3, window_bounds = array<i64: 1, 128, 2>}]} {
    %c0_i32 = arith.constant 0 : i32
    %0 = arith.cmpi eq, %arg2, %c0_i32 : i32
    %1 = arith.extui %0 : i1 to i32
    %c0_i32_0 = arith.constant 0 : i32
    %2 = arith.cmpi ne, %1, %c0_i32_0 : i32
    scf.if %2 {
      %cst_27 = arith.constant 0xFF800000 : f32
      %44 = vector.broadcast %cst_27 : f32 to vector<128x1xf32>
      %c0_28 = arith.constant 0 : index
      %c0_29 = arith.constant 0 : index
      %45 = vector.load %arg7[%c0_28, %c0_29] : memref<128x1xf32, #tpu.memory_space<vmem>>, vector<128x1xf32>
      tpu.vector_store %arg7[%c0_28, %c0_29], %44 {strides = array<i32>} : memref<128x1xf32, #tpu.memory_space<vmem>>, vector<128x1xf32>,
      %cst_30 = arith.constant 0.000000e+00 : f32
      %46 = vector.broadcast %cst_30 : f32 to vector<128x1xf32>
      %c0_31 = arith.constant 0 : index
      %c0_32 = arith.constant 0 : index
      %47 = vector.load %arg8[%c0_31, %c0_32] : memref<128x1xf32, #tpu.memory_space<vmem>>, vector<128x1xf32>
      tpu.vector_store %arg8[%c0_31, %c0_32], %46 {strides = array<i32>} : memref<128x1xf32, #tpu.memory_space<vmem>>, vector<128x1xf32>,
      %cst_33 = arith.constant 0.000000e+00 : f32
      %48 = vector.broadcast %cst_33 : f32 to vector<128x2xf32>
      %c0_34 = arith.constant 0 : index
      %c0_35 = arith.constant 0 : index
      %49 = vector.load %arg9[%c0_34, %c0_35] : memref<128x2xf32, #tpu.memory_space<vmem>>, vector<128x2xf32>
      tpu.vector_store %arg9[%c0_34, %c0_35], %48 {strides = array<i32>} : memref<128x2xf32, #tpu.memory_space<vmem>>, vector<128x2xf32>,
    } else {
    }
    %c0 = arith.constant 0 : index
    %c0_1 = arith.constant 0 : index
    %c0_2 = arith.constant 0 : index
    %3 = vector.load %arg3[%c0, %c0_1, %c0_2] : memref<1x8x128xbf16, #tpu.memory_space<vmem>>, vector<1x8x128xbf16>
    %4 = vector.shape_cast %3 : vector<1x8x128xbf16> to vector<8x128xbf16>
    %cst = arith.constant 3.535160e-01 : bf16
    %5 = vector.broadcast %cst : bf16 to vector<8x128xbf16>
    %6 = arith.mulf %4, %5 : vector<8x128xbf16>
    %c0_3 = arith.constant 0 : index
    %c0_4 = arith.constant 0 : index
    %c0_5 = arith.constant 0 : index
    %7 = vector.load %arg4[%c0_3, %c0_4, %c0_5] : memref<1x8x128xbf16, #tpu.memory_space<vmem>>, vector<1x8x128xbf16>
    %8 = vector.shape_cast %7 : vector<1x8x128xbf16> to vector<8x128xbf16>
    %cst_6 = arith.constant dense<0.000000e+00> : vector<128x128xf32>
    %9 = tpu.matmul %6, %8, %cst_6 {dimension_numbers = #tpu.dot_dimension_numbers<[0], [0], [1], [1], [0, 1, 1, 1], [], []>} : vector<8x128xbf16>, vector<8x128xbf16>, vector<128x128xf32> -> vector<128x128xf32>
    %c128_i32 = arith.constant 128 : i32
    %10 = arith.muli %arg2, %c128_i32 : i32
    %11 = tpu.iota {dimensions = array<i32: 1>} : vector<128x128xi32>
    %12 = vector.broadcast %10 : i32 to vector<128x128xi32>
    %13 = arith.addi %12, %11 : vector<128x128xi32>
    %c64_i32 = arith.constant 64 : i32
    %14 = vector.broadcast %c64_i32 : i32 to vector<128x128xi32>
    %15 = arith.cmpi slt, %13, %14 : vector<128x128xi32>
    %cst_7 = arith.constant -1.000000e+30 : f32
    %16 = vector.broadcast %cst_7 : f32 to vector<128x128xf32>
    %17 = arith.select %15, %9, %16 : vector<128x128xi1>, vector<128x128xf32>
    %c0_8 = arith.constant 0 : index
    %c0_9 = arith.constant 0 : index
    %18 = vector.load %arg7[%c0_8, %c0_9] : memref<128x1xf32, #tpu.memory_space<vmem>>, vector<128x1xf32>
    %cst_10 = arith.constant dense<0xFF800000> : vector<128xf32>
    %19 = vector.multi_reduction <maximumf>, %17, %cst_10 [1] : vector<128x128xf32> to vector<128xf32>
    %20 = vector.shape_cast %19 : vector<128xf32> to vector<128x1xf32>
    %21 = arith.maximumf %18, %20 : vector<128x1xf32>
    %22 = arith.subf %18, %21 : vector<128x1xf32>
    %23 = math.exp %22 : vector<128x1xf32>
    %24 = vector.broadcast %21 : vector<128x1xf32> to vector<128x128xf32>
    %25 = arith.subf %17, %24 : vector<128x128xf32>
    %26 = math.exp %25 : vector<128x128xf32>
    %c0_11 = arith.constant 0 : index
    %c0_12 = arith.constant 0 : index
    %27 = vector.load %arg8[%c0_11, %c0_12] : memref<128x1xf32, #tpu.memory_space<vmem>>, vector<128x1xf32>
    %28 = arith.mulf %23, %27 : vector<128x1xf32>
    %cst_13 = arith.constant dense<0.000000e+00> : vector<128xf32>
    %29 = vector.multi_reduction <add>, %26, %cst_13 [1] : vector<128x128xf32> to vector<128xf32>
    %30 = vector.shape_cast %29 : vector<128xf32> to vector<128x1xf32>
    %31 = arith.addf %28, %30 : vector<128x1xf32>
    %c0_14 = arith.constant 0 : index
    %c0_15 = arith.constant 0 : index
    %32 = vector.load %arg8[%c0_14, %c0_15] : memref<128x1xf32, #tpu.memory_space<vmem>>, vector<128x1xf32>
    tpu.vector_store %arg8[%c0_14, %c0_15], %31 {strides = array<i32>} : memref<128x1xf32, #tpu.memory_space<vmem>>, vector<128x1xf32>,
    %c0_16 = arith.constant 0 : index
    %c0_17 = arith.constant 0 : index
    %33 = vector.load %arg5[%c0_16, %c0_17] : memref<2x128xf32, #tpu.memory_space<vmem>>, vector<2x128xf32>
    %cst_18 = arith.constant dense<0.000000e+00> : vector<128x2xf32>
    %34 = tpu.matmul %26, %33, %cst_18 {dimension_numbers = #tpu.dot_dimension_numbers<[1], [1], [0], [0], [0, 0, 1, 0], [], []>} : vector<128x128xf32>, vector<2x128xf32>, vector<128x2xf32> -> vector<128x2xf32>
    %c0_19 = arith.constant 0 : index
    %c0_20 = arith.constant 0 : index
    %35 = vector.load %arg9[%c0_19, %c0_20] : memref<128x2xf32, #tpu.memory_space<vmem>>, vector<128x2xf32>
    %36 = vector.broadcast %23 : vector<128x1xf32> to vector<128x2xf32>
    %37 = arith.mulf %36, %35 : vector<128x2xf32>
    %38 = arith.addf %37, %34 : vector<128x2xf32>
    %c0_21 = arith.constant 0 : index
    %c0_22 = arith.constant 0 : index
    %39 = vector.load %arg9[%c0_21, %c0_22] : memref<128x2xf32, #tpu.memory_space<vmem>>, vector<128x2xf32>
    tpu.vector_store %arg9[%c0_21, %c0_22], %38 {strides = array<i32>} : memref<128x2xf32, #tpu.memory_space<vmem>>, vector<128x2xf32>,
    %c0_23 = arith.constant 0 : index
    %c0_24 = arith.constant 0 : index
    %40 = vector.load %arg7[%c0_23, %c0_24] : memref<128x1xf32, #tpu.memory_space<vmem>>, vector<128x1xf32>
    tpu.vector_store %arg7[%c0_23, %c0_24], %21 {strides = array<i32>} : memref<128x1xf32, #tpu.memory_space<vmem>>, vector<128x1xf32>,
    %c0_i32_25 = arith.constant 0 : i32
    %41 = arith.cmpi eq, %arg2, %c0_i32_25 : i32
    %42 = arith.extui %41 : i1 to i32
    %c0_i32_26 = arith.constant 0 : i32
    %43 = arith.cmpi ne, %42, %c0_i32_26 : i32
    scf.if %43 {
      %c0_27 = arith.constant 0 : index
      %c0_28 = arith.constant 0 : index
      %44 = vector.load %arg9[%c0_27, %c0_28] : memref<128x2xf32, #tpu.memory_space<vmem>>, vector<128x2xf32>
      %c0_29 = arith.constant 0 : index
      %c0_30 = arith.constant 0 : index
      %45 = vector.load %arg8[%c0_29, %c0_30] : memref<128x1xf32, #tpu.memory_space<vmem>>, vector<128x1xf32>
      %46 = vector.broadcast %45 : vector<128x1xf32> to vector<128x2xf32>
      %47 = arith.divf %44, %46 : vector<128x2xf32>
      %c0_31 = arith.constant 0 : index
      %c0_32 = arith.constant 0 : index
      %c0_33 = arith.constant 0 : index
      %48 = vector.load %arg6[%c0_31, %c0_32, %c0_33] : memref<1x128x2xf32, #tpu.memory_space<vmem>>, vector<1x128x2xf32>
      %49 = vector.shape_cast %48 : vector<1x128x2xf32> to vector<128x2xf32>
      %50 = vector.shape_cast %47 : vector<128x2xf32> to vector<1x128x2xf32>
      tpu.vector_store %arg6[%c0_31, %c0_32, %c0_33], %50 {strides = array<i32>} : memref<1x128x2xf32, #tpu.memory_space<vmem>>, vector<1x128x2xf32>,
    } else {
    }
    return
  }
  func.func @transform_0(%arg0: i32, %arg1: i32, %arg2: i32) -> (i32, i32, i32) {
    %c0_i32 = arith.constant 0 : i32
    %c0_i32_0 = arith.constant 0 : i32
    return %arg0, %c0_i32, %arg1 : i32, i32, i32
  }
  func.func @transform_1(%arg0: i32, %arg1: i32, %arg2: i32) -> (i32, i32, i32) {
    %c0_i32 = arith.constant 0 : i32
    %c0_i32_0 = arith.constant 0 : i32
    return %arg0, %c0_i32, %arg2 : i32, i32, i32
  }
  func.func @transform_2(%arg0: i32, %arg1: i32, %arg2: i32) -> (i32, i32) {
    %c0_i32 = arith.constant 0 : i32
    %c0_i32_0 = arith.constant 0 : i32
    return %c0_i32, %arg2 : i32, i32
  }
  func.func @transform_3(%arg0: i32, %arg1: i32, %arg2: i32) -> (i32, i32, i32) {
    %c0_i32 = arith.constant 0 : i32
    %c0_i32_0 = arith.constant 0 : i32
    return %arg0, %arg1, %c0_i32 : i32, i32, i32
  }
}

</mosaic_0001>

<llo_original>
// kernel: tpu_custom_call.1
$region0: #{tpu_custom_call.1}
  #allocation0 [shape = 'u32[]', space=smem, size = 0x4, offset = 0x4, fixed_abs, tag = 'smem constant byte address 0x4 - core index']
  #allocation1 [shape = 'u32[144,128]{1,0:T(1,128)}', space=vmem, size = 0x12000, scoped, tag = 'internal scratch']
  #allocation2 [shape = 'f32[128,1]{1,0:T(8,128)}', space=vmem, size = 0x10000, scoped, tag = 'scratch operand']
  #allocation3 [shape = 'f32[128,1]{1,0:T(8,128)}', space=vmem, size = 0x10000, scoped, tag = 'scratch operand']
  #allocation4 [shape = 'f32[128,2]{1,0:T(8,128)}', space=vmem, size = 0x10000, scoped, tag = 'scratch operand']
  %s0 = inlined_call_operand.hbm [shape: bf16[2,8,128], index: 0, kind: input, shape index: {}]
  %s1 = inlined_call_operand.hbm [shape: bf16[2,8,128], index: 1, kind: input, shape index: {}]
  %s2 = inlined_call_operand.vmem [shape: f32[2,128], index: 2, kind: input, shape index: {}]
  %s3 = inlined_call_operand.vmem [shape: f32[2,128,2], index: 3, kind: output, shape index: {}]
  %s4 = sld [smem:[#allocation0]]
  $region61: #{tpu_custom_call.1} parent=0
    _
  %s6 = ssub.s32 1, %s4
  %s7 = scalar_select 0, %s6, %s4
  $region1: #{tpu_custom_call.1} parent=0
    #allocation5 [shape = 'u8[4096]{0}', space=vmem, size = 0x1000, scoped, tag = 'input window, operand 0']
    #allocation6 [shape = 's32[2]{0}', space=sflag, size = 0x8, scoped, tag = 'scoped memory for tpu_custom_call.1']
    #allocation7 [shape = 'u8[4096]{0}', space=vmem, size = 0x1000, scoped, tag = 'input window, operand 1']
    #allocation8 [shape = 's32[2]{0}', space=sflag, size = 0x8, scoped, tag = 'scoped memory for tpu_custom_call.1']
    %8 = vsyncpa [#allocation6], 0
    %s9 = scalar_lea.sflag [#allocation6], 1
    %10 = vsyncpa %s9, 0
    %11 = vsyncpa [#allocation8], 0
    %s12 = scalar_lea.sflag [#allocation8], 1
    %13 = vsyncpa %s12, 0
    loop: start=0, step=1, limit=4
    $region2: #{tpu_custom_call.1} parent=1 // loop_pre_header
      _
    $region3: #{tpu_custom_call.1} parent=1 // loop_header
      %s15 = sphi 0, %s19
      %p16 = scmp.ge.s32.totalorder %s15, 4
      %s22 = sphi 0, %s41
      %s23 = sphi 0, %s37
      %s24 = sphi 0, %s33
      %s25 = sphi 0, %s22
      %s26 = sphi 0, %s23
      %s27 = sphi 0, %s24
      %s28 = sphi 0, %s25
      %s29 = sphi 0, %s26
      %s30 = sphi 0, %s27
      %s46 = sphi 0, %s48
      %s49 = sphi 0, %s46
      %s50 = sphi 0, %s49
      %s66 = sphi 0, %s50
      %s74 = sphi 0, %s76
      %s77 = sphi 0, %s74
      %s78 = sphi 0, %s77
      %s94 = sphi 0, %s78
      %s100 = sphi 0, %s102
      %s103 = sphi 0, %s100
      %s104 = sphi 0, %s103
      %s120 = sphi 0, %s104
      %s128 = sphi 0, %s130
      %s131 = sphi 0, %s128
      %s132 = sphi 0, %s131
      %s148 = sphi 0, %s132
    $region4: #{tpu_custom_call.1} parent=1 // loop_header_branch
      %18 = sbr.rel (%p16) target = $region8
    $region5: #{tpu_custom_call.1} parent=1 // loop_body
      %s20 = ssub.s32 %s15, 1
      %s21 = ssub.s32 %s15, 2
      %s31 = sadd.s32 1, %s24
      %p32 = scmp.ge.s32.totalorder %s31, 1
      %s33 = scalar_select %p32, 0, %s31
      %s34 = sadd.s32 1, %s23
      %s35 = scalar_select %p32, %s34, %s23
      %p36 = scmp.ge.s32.totalorder %s35, 1
      %s37 = scalar_select %p36, 0, %s35
      %s38 = sadd.s32 1, %s22
      %s39 = scalar_select %p36, %s38, %s22
      %p40 = scmp.ge.s32.totalorder %s39, 2
      %s41 = scalar_select %p40, 0, %s39
      %s42 = ssub.s32 %s22, %s41
      %s43 = ssub.s32 %s23, %s37
      %s44 = sor.u32 %s42, %s43
      %p45 = scmp.eq.s32.totalorder %s44, 0
      %s47 = sadd.s32 %s46, 1
      %s48 = scalar_select %p45, %s46, %s47
      %p51 = pneg %p45
      %p52 = scmp.eq.s32.totalorder %s15, 1
      %p53 = por %p51, %p52
      %p54 = scmp.ne.s32.totalorder %s46, %s49
      %p55 = scmp.eq.s32.totalorder %s15, 0
      %p56 = por %p54, %p55
      %p57 = scmp.ne.s32.totalorder %s46, %s49
      %p58 = scmp.eq.s32.totalorder %s20, 1
      %p59 = por %p57, %p58
      %p60 = scmp.ne.s32.totalorder %s49, %s50
      %p61 = scmp.eq.s32.totalorder %s20, 0
      %p62 = por %p60, %p61
      %p63 = scmp.ne.s32.totalorder %s49, %s50
      %p64 = scmp.eq.s32.totalorder %s21, 1
      %p65 = por %p63, %p64
      %p67 = scmp.ne.s32.totalorder %s50, %s66
      %p68 = scmp.eq.s32.totalorder %s21, 0
      %p69 = por %p67, %p68
      %s70 = ssub.s32 %s22, %s41
      %s71 = ssub.s32 %s24, %s33
      %s72 = sor.u32 %s70, %s71
      %p73 = scmp.eq.s32.totalorder %s72, 0
      %s75 = sadd.s32 %s74, 1
      %s76 = scalar_select %p73, %s74, %s75
      %p79 = pneg %p73
      %p80 = scmp.eq.s32.totalorder %s15, 1
      %p81 = por %p79, %p80
      %p82 = scmp.ne.s32.totalorder %s74, %s77
      %p83 = scmp.eq.s32.totalorder %s15, 0
      %p84 = por %p82, %p83
      %p85 = scmp.ne.s32.totalorder %s74, %s77
      %p86 = scmp.eq.s32.totalorder %s20, 1
      %p87 = por %p85, %p86
      %p88 = scmp.ne.s32.totalorder %s77, %s78
      %p89 = scmp.eq.s32.totalorder %s20, 0
      %p90 = por %p88, %p89
      %p91 = scmp.ne.s32.totalorder %s77, %s78
      %p92 = scmp.eq.s32.totalorder %s21, 1
      %p93 = por %p91, %p92
      %p95 = scmp.ne.s32.totalorder %s78, %s94
      %p96 = scmp.eq.s32.totalorder %s21, 0
      %p97 = por %p95, %p96
      %s98 = ssub.s32 %s24, %s33
      %p99 = scmp.eq.s32.totalorder %s98, 0
      %s101 = sadd.s32 %s100, 1
      %s102 = scalar_select %p99, %s100, %s101
      %p105 = pneg %p99
      %p106 = scmp.eq.s32.totalorder %s15, 1
      %p107 = por %p105, %p106
      %p108 = scmp.ne.s32.totalorder %s100, %s103
      %p109 = scmp.eq.s32.totalorder %s15, 0
      %p110 = por %p108, %p109
      %p111 = scmp.ne.s32.totalorder %s100, %s103
      %p112 = scmp.eq.s32.totalorder %s20, 1
      %p113 = por %p111, %p112
      %p114 = scmp.ne.s32.totalorder %s103, %s104
      %p115 = scmp.eq.s32.totalorder %s20, 0
      %p116 = por %p114, %p115
      %p117 = scmp.ne.s32.totalorder %s103, %s104
      %p118 = scmp.eq.s32.totalorder %s21, 1
      %p119 = por %p117, %p118
      %p121 = scmp.ne.s32.totalorder %s104, %s120
      %p122 = scmp.eq.s32.totalorder %s21, 0
      %p123 = por %p121, %p122
      %s124 = ssub.s32 %s22, %s41
      %s125 = ssub.s32 %s23, %s37
      %s126 = sor.u32 %s124, %s125
      %p127 = scmp.eq.s32.totalorder %s126, 0
      %s129 = sadd.s32 %s128, 1
      %s130 = scalar_select %p127, %s128, %s129
      %p133 = pneg %p127
      %p134 = scmp.eq.s32.totalorder %s15, 1
      %p135 = por %p133, %p134
      %p136 = scmp.ne.s32.totalorder %s128, %s131
      %p137 = scmp.eq.s32.totalorder %s15, 0
      %p138 = por %p136, %p137
      %p139 = scmp.ne.s32.totalorder %s128, %s131
      %p140 = scmp.eq.s32.totalorder %s20, 1
      %p141 = por %p139, %p140
      %p142 = scmp.ne.s32.totalorder %s131, %s132
      %p143 = scmp.eq.s32.totalorder %s20, 0
      %p144 = por %p142, %p143
      %p145 = scmp.ne.s32.totalorder %s131, %s132
      %p146 = scmp.eq.s32.totalorder %s21, 1
      %p147 = por %p145, %p146
      %p149 = scmp.ne.s32.totalorder %s132, %s148
      %p150 = scmp.eq.s32.totalorder %s21, 0
      %p151 = por %p149, %p150
      %p152 = scmp.le.s32.totalorder 1, %s15
      %p153 = scmp.lt.s32.totalorder %s15, 3
      %p154 = pnand %p152, %p153
      %p155 = pneg %p154
      // Predicated region
      $region9: #{tpu_custom_call.1} parent=5 // pred_check
        _
      $region10: #{tpu_custom_call.1} parent=5 // pred_check_branch
        %157 = sbr.rel (%p154) target = $region12
      $region11: #{tpu_custom_call.1} parent=5 // pred_region
        %s158 = ssub.s32 %s15, 1
        // Predicated region
        $region13: #{tpu_custom_call.1} parent=11 // pred_check
          %p159 = pneg %p116
        $region14: #{tpu_custom_call.1} parent=11 // pred_check_branch
          %161 = sbr.rel (%p159) target = $region16
        $region15: #{tpu_custom_call.1} parent=11 // pred_region
          %p162 = scmp.lt.s32.totalorder %s27, 0
          %s163 = scalar_select %p162, %s27, 0
          %s164 = smul.addr %s163, 2
          %s165 = scalar_lea.vmem %s2, %s164
        $region16: #{tpu_custom_call.1} parent=11 // pred_fallthru
          _
      $region12: #{tpu_custom_call.1} parent=5 // pred_fallthru
        _
      %p166 = scmp.lt.s32.totalorder %s15, 2
      // Predicated region
      $region17: #{tpu_custom_call.1} parent=5 // pred_check
        %p167 = pneg %p166
      $region18: #{tpu_custom_call.1} parent=5 // pred_check_branch
        %169 = sbr.rel (%p167) target = $region20
      $region19: #{tpu_custom_call.1} parent=5 // pred_region
        // Predicated region
        $region21: #{tpu_custom_call.1} parent=19 // pred_check
          %p170 = pneg %p56
        $region22: #{tpu_custom_call.1} parent=19 // pred_check_branch
          %172 = sbr.rel (%p170) target = $region24
        $region23: #{tpu_custom_call.1} parent=19 // pred_region
          %s173 = sand.u32 %s46, 1
          %s174 = scalar_lea.sflag [#allocation6], %s173
          %s175 = sand.u32 %s46, 1
          %s176 = smul.addr %s175, 4
          %s177 = scalar_lea.vmem [#allocation5], %s176
          %s179 = ssub.s32 64, 64
          %180 = vsyncadd %s174, %s179
          %s181 = sadd.s32 %s23, %s22
          %s182 = smul.addr %s181, 64
          %s183 = scalar_lea.hbm %s0, %s182
          %s185 = sshll.u32 %s177, 4
          %s186 = int_to_ptr.vmem [resolvable:$true] %s185
          %188 = dma.hbm_to_vmem [thread:$0]  %s183, 64, %s186, %s174
        $region24: #{tpu_custom_call.1} parent=19 // pred_fallthru
          _
        // Predicated region
        $region25: #{tpu_custom_call.1} parent=19 // pred_check
          %p189 = pneg %p84
        $region26: #{tpu_custom_call.1} parent=19 // pred_check_branch
          %191 = sbr.rel (%p189) target = $region28
        $region27: #{tpu_custom_call.1} parent=19 // pred_region
          %s192 = sand.u32 %s74, 1
          %s193 = scalar_lea.sflag [#allocation8], %s192
          %s194 = sand.u32 %s74, 1
          %s195 = smul.addr %s194, 4
          %s196 = scalar_lea.vmem [#allocation7], %s195
          %s198 = ssub.s32 64, 64
          %199 = vsyncadd %s193, %s198
          %s200 = sadd.s32 %s24, %s22
          %s201 = smul.addr %s200, 64
          %s202 = scalar_lea.hbm %s1, %s201
          %s204 = sshll.u32 %s196, 4
          %s205 = int_to_ptr.vmem [resolvable:$true] %s204
          %207 = dma.hbm_to_vmem [thread:$0]  %s202, 64, %s205, %s193
        $region28: #{tpu_custom_call.1} parent=19 // pred_fallthru
          _
      $region20: #{tpu_custom_call.1} parent=5 // pred_fallthru
        _
      %p208 = scmp.le.s32.totalorder 1, %s15
      %p209 = scmp.lt.s32.totalorder %s15, 3
      %p210 = pnand %p208, %p209
      %p211 = pneg %p210
      // Predicated region
      $region29: #{tpu_custom_call.1} parent=5 // pred_check
        _
      $region30: #{tpu_custom_call.1} parent=5 // pred_check_branch
        %213 = sbr.rel (%p210) target = $region32
      $region31: #{tpu_custom_call.1} parent=5 // pred_region
        %s214 = ssub.s32 %s15, 1
        %s215 = sand.u32 %s49, 1
        %s216 = scalar_lea.sflag [#allocation6], %s215
        %s217 = sand.u32 %s49, 1
        %s218 = smul.addr %s217, 4
        %s219 = scalar_lea.vmem [#allocation5], %s218
        // Predicated region
        $region33: #{tpu_custom_call.1} parent=31 // pred_check
          %p220 = pneg %p62
        $region34: #{tpu_custom_call.1} parent=31 // pred_check_branch
          %222 = sbr.rel (%p220) target = $region36
        $region35: #{tpu_custom_call.1} parent=31 // pred_region
          %223 = dma.done %s216, 64
        $region36: #{tpu_custom_call.1} parent=31 // pred_fallthru
          _
        %s224 = sand.u32 %s77, 1
        %s225 = scalar_lea.sflag [#allocation8], %s224
        %s226 = sand.u32 %s77, 1
        %s227 = smul.addr %s226, 4
        %s228 = scalar_lea.vmem [#allocation7], %s227
        // Predicated region
        $region37: #{tpu_custom_call.1} parent=31 // pred_check
          %p229 = pneg %p90
        $region38: #{tpu_custom_call.1} parent=31 // pred_check_branch
          %231 = sbr.rel (%p229) target = $region40
        $region39: #{tpu_custom_call.1} parent=31 // pred_region
          %232 = dma.done %s225, 64
        $region40: #{tpu_custom_call.1} parent=31 // pred_fallthru
          _
        %s233 = sand.u32 %s49, 1
        %s234 = scalar_lea.sflag [#allocation6], %s233
        %s235 = sand.u32 %s49, 1
        %s236 = smul.addr %s235, 4
        %s237 = scalar_lea.vmem [#allocation5], %s236
        %p238 = pneg %p62
        %p239 = pneg %p59
        %s240 = sand.u32 %s77, 1
        %s241 = scalar_lea.sflag [#allocation8], %s240
        %s242 = sand.u32 %s77, 1
        %s243 = smul.addr %s242, 4
        %s244 = scalar_lea.vmem [#allocation7], %s243
        %p245 = pneg %p90
        %p246 = pneg %p87
        %p247 = scmp.lt.s32.totalorder %s27, 0
        %s248 = scalar_select %p247, %s27, 0
        %s249 = smul.addr %s248, 2
        %s250 = scalar_lea.vmem %s2, %s249
        %p251 = pneg %p116
        %p252 = pneg %p113
        %p253 = pneg %p144
        %p254 = pneg %p141
        %s255 = smul.u32 16, %s26
        %p256 = scmp.lt.s32.totalorder %s25, 1
        %s257 = scalar_select %p256, %s25, 1
        %p258 = scmp.lt.s32.totalorder %s255, 15
        %s259 = scalar_select %p258, %s255, 15
        %s260 = smul.addr %s257, 16
        %s261 = sadd.s32 %s259, %s260
        %s262 = smul.addr %s261, 8
        %s263 = scalar_lea.vmem %s3, %s262
        %p264 = scmp.lt.s32.totalorder %s27, 0
        %s265 = scalar_select %p264, %s27, 0
        %s266 = smul.addr %s265, 2
        %s267 = scalar_lea.vmem %s2, %s266
        %s268 = smul.u32 16, %s26
        %p269 = scmp.lt.s32.totalorder %s25, 1
        %s270 = scalar_select %p269, %s25, 1
        %p271 = scmp.lt.s32.totalorder %s268, 15
        %s272 = scalar_select %p271, %s268, 15
        %s273 = smul.addr %s270, 16
        %s274 = sadd.s32 %s272, %s273
        %s275 = smul.addr %s274, 8
        %s276 = scalar_lea.vmem %s3, %s275
        %s277 = smul.u32 16, %s26
        %p280 = scmp.eq.s32.totalorder %s27, 0
        // Predicated region
        $region41: #{tpu_custom_call.1} parent=31 // pred_check
          %p281 = pneg %p280
        $region42: #{tpu_custom_call.1} parent=31 // pred_check_branch
          %283 = sbr.rel (%p281) target = $region44
        $region43: #{tpu_custom_call.1} parent=31 // pred_region
          %vm284 = vcmask 7168
          %285 = vst.msk [vmem:[#allocation2] sm:$0xff] %vm284, -inf
          %286 = vst.msk [vmem:[#allocation2 + $0x8] sm:$0xff] %vm284, -inf
          %287 = vst.msk [vmem:[#allocation2 + $0x10] sm:$0xff] %vm284, -inf
          %288 = vst.msk [vmem:[#allocation2 + $0x18] sm:$0xff] %vm284, -inf
          %289 = vst.msk [vmem:[#allocation2 + $0x20] sm:$0xff] %vm284, -inf
          %290 = vst.msk [vmem:[#allocation2 + $0x28] sm:$0xff] %vm284, -inf
          %291 = vst.msk [vmem:[#allocation2 + $0x30] sm:$0xff] %vm284, -inf
          %292 = vst.msk [vmem:[#allocation2 + $0x38] sm:$0xff] %vm284, -inf
          %293 = vst.msk [vmem:[#allocation2 + $0x40] sm:$0xff] %vm284, -inf
          %294 = vst.msk [vmem:[#allocation2 + $0x48] sm:$0xff] %vm284, -inf
          %295 = vst.msk [vmem:[#allocation2 + $0x50] sm:$0xff] %vm284, -inf
          %296 = vst.msk [vmem:[#allocation2 + $0x58] sm:$0xff] %vm284, -inf
          %297 = vst.msk [vmem:[#allocation2 + $0x60] sm:$0xff] %vm284, -inf
          %298 = vst.msk [vmem:[#allocation2 + $0x68] sm:$0xff] %vm284, -inf
          %299 = vst.msk [vmem:[#allocation2 + $0x70] sm:$0xff] %vm284, -inf
          %300 = vst.msk [vmem:[#allocation2 + $0x78] sm:$0xff] %vm284, -inf
          %301 = vst.msk [vmem:[#allocation3] sm:$0xff] %vm284, 0.0
          %302 = vst.msk [vmem:[#allocation3 + $0x8] sm:$0xff] %vm284, 0.0
          %303 = vst.msk [vmem:[#allocation3 + $0x10] sm:$0xff] %vm284, 0.0
          %304 = vst.msk [vmem:[#allocation3 + $0x18] sm:$0xff] %vm284, 0.0
          %305 = vst.msk [vmem:[#allocation3 + $0x20] sm:$0xff] %vm284, 0.0
          %306 = vst.msk [vmem:[#allocation3 + $0x28] sm:$0xff] %vm284, 0.0
          %307 = vst.msk [vmem:[#allocation3 + $0x30] sm:$0xff] %vm284, 0.0
          %308 = vst.msk [vmem:[#allocation3 + $0x38] sm:$0xff] %vm284, 0.0
          %309 = vst.msk [vmem:[#allocation3 + $0x40] sm:$0xff] %vm284, 0.0
          %310 = vst.msk [vmem:[#allocation3 + $0x48] sm:$0xff] %vm284, 0.0
          %311 = vst.msk [vmem:[#allocation3 + $0x50] sm:$0xff] %vm284, 0.0
          %312 = vst.msk [vmem:[#allocation3 + $0x58] sm:$0xff] %vm284, 0.0
          %313 = vst.msk [vmem:[#allocation3 + $0x60] sm:$0xff] %vm284, 0.0
          %314 = vst.msk [vmem:[#allocation3 + $0x68] sm:$0xff] %vm284, 0.0
          %315 = vst.msk [vmem:[#allocation3 + $0x70] sm:$0xff] %vm284, 0.0
          %316 = vst.msk [vmem:[#allocation3 + $0x78] sm:$0xff] %vm284, 0.0
          %vm317 = vcmask 15360
          %318 = vst.msk [vmem:[#allocation4] sm:$0xff] %vm317, 0.0
          %319 = vst.msk [vmem:[#allocation4 + $0x8] sm:$0xff] %vm317, 0.0
          %320 = vst.msk [vmem:[#allocation4 + $0x10] sm:$0xff] %vm317, 0.0
          %321 = vst.msk [vmem:[#allocation4 + $0x18] sm:$0xff] %vm317, 0.0
          %322 = vst.msk [vmem:[#allocation4 + $0x20] sm:$0xff] %vm317, 0.0
          %323 = vst.msk [vmem:[#allocation4 + $0x28] sm:$0xff] %vm317, 0.0
          %324 = vst.msk [vmem:[#allocation4 + $0x30] sm:$0xff] %vm317, 0.0
          %325 = vst.msk [vmem:[#allocation4 + $0x38] sm:$0xff] %vm317, 0.0
          %326 = vst.msk [vmem:[#allocation4 + $0x40] sm:$0xff] %vm317, 0.0
          %327 = vst.msk [vmem:[#allocation4 + $0x48] sm:$0xff] %vm317, 0.0
          %328 = vst.msk [vmem:[#allocation4 + $0x50] sm:$0xff] %vm317, 0.0
          %329 = vst.msk [vmem:[#allocation4 + $0x58] sm:$0xff] %vm317, 0.0
          %330 = vst.msk [vmem:[#allocation4 + $0x60] sm:$0xff] %vm317, 0.0
          %331 = vst.msk [vmem:[#allocation4 + $0x68] sm:$0xff] %vm317, 0.0
          %332 = vst.msk [vmem:[#allocation4 + $0x70] sm:$0xff] %vm317, 0.0
          %333 = vst.msk [vmem:[#allocation4 + $0x78] sm:$0xff] %vm317, 0.0
        $region44: #{tpu_custom_call.1} parent=31 // pred_fallthru
          _
        %v334 = vld [vmem:[%s219] sm:$0xf]
        %v335 = vmul.bf16 %v334, 1052065461
        %v336 = vld [vmem:[%s228] sm:$0xf]
        %337 = vxpose.xlu0.c.b16.start [1/8] %v335, 128
        %338 = vxpose.xlu0.c.b16.cont [2/8] 0, 128
        %339 = vxpose.xlu0.c.b16.cont [3/8] 0, 128
        %340 = vxpose.xlu0.c.b16.cont [4/8] 0, 128
        %341 = vxpose.xlu0.c.b16.cont [5/8] 0, 128
        %342 = vxpose.xlu0.c.b16.cont [6/8] 0, 128
        %343 = vxpose.xlu0.c.b16.cont [7/8] 0, 128
        %344 = vxpose.xlu0.c.b16.end [8/8] 0, 128
        %v345 = vpop.trf.xlu0
        %v346 = vpop.trf.xlu0
        %v347 = vpop.trf.xlu0
        %v348 = vpop.trf.xlu0
        %v349 = vpop.trf.xlu0
        %v350 = vpop.trf.xlu0
        %v351 = vpop.trf.xlu0
        %v352 = vpop.trf.xlu0
        %vm353 = vcmask 64512
        %v355 = vsel %vm353, %v345, 0
        %v358 = vsel %vm353, %v346, 0
        %v361 = vsel %vm353, %v347, 0
        %v364 = vsel %vm353, %v348, 0
        %v367 = vsel %vm353, %v349, 0
        %v370 = vsel %vm353, %v350, 0
        %v373 = vsel %vm353, %v351, 0
        %v376 = vsel %vm353, %v352, 0
        %vm378 = vcmask 1043456
        %v380 = vsel %vm378, %v336, 0
        %382 = vmatprep.subr.bf16.mxu0 0
        %383 = vmatpush1.bf16.msra.mxu0 %v380
        %384 = vmatprep.subr.bf16.mxu0 0
        %385 = vmatpush1.bf16.msra.mxu0 0
        %386 = vmatprep.subr.bf16.mxu0 0
        %387 = vmatpush1.bf16.msra.mxu0 0
        %388 = vmatprep.subr.bf16.mxu0 0
        %389 = vmatpush1.bf16.msra.mxu0 0
        %390 = vmatprep.subr.bf16.mxu0 0
        %391 = vmatpush1.bf16.msra.mxu0 0
        %392 = vmatprep.subr.bf16.mxu0 0
        %393 = vmatpush1.bf16.msra.mxu0 0
        %394 = vmatprep.subr.bf16.mxu0 0
        %395 = vmatpush1.bf16.msra.mxu0 0
        %396 = vmatprep.subr.bf16.mxu0 0
        %397 = vmatpush1.bf16.msra.mxu0 0
        %398 = vmatprep.subr.bf16.mxu0 0
        %399 = vmatpush1.bf16.msra.mxu0 0
        %400 = vmatprep.subr.bf16.mxu0 0
        %401 = vmatpush1.bf16.msra.mxu0 0
        %402 = vmatprep.subr.bf16.mxu0 0
        %403 = vmatpush1.bf16.msra.mxu0 0
        %404 = vmatprep.subr.bf16.mxu0 0
        %405 = vmatpush1.bf16.msra.mxu0 0
        %406 = vmatprep.subr.bf16.mxu0 0
        %407 = vmatpush1.bf16.msra.mxu0 0
        %408 = vmatprep.subr.bf16.mxu0 0
        %409 = vmatpush1.bf16.msra.mxu0 0
        %410 = vmatprep.subr.bf16.mxu0 0
        %411 = vmatpush1.bf16.msra.mxu0 0
        %412 = vmatprep.subr.bf16.mxu0 0
        %413 = vmatpush1.bf16.msra.mxu0 0
        %414 = vmatprep.mubr.bf16.mxu0 0
        %415 = vmatmul.mubr.bf16.gmra.mrb[0].mxu0 %v355
        %v416 = vpop.f32.mrb[0].mxu0
        %v417 = vadd.f32 0.0, %v416
        %v418 = vpop.f32.mrb[0].mxu0
        %v419 = vpop.f32.mrb[0].mxu0
        %v420 = vadd.f32 0.0, %v419
        %v421 = vpop.f32.mrb[0].mxu0
        %422 = vmatprep.mubr.bf16.mxu0 0
        %423 = vmatmul.mubr.bf16.gmra.mrb[0].mxu0 %v358
        %v424 = vpop.f32.mrb[0].mxu0
        %v425 = vadd.f32 0.0, %v424
        %v426 = vpop.f32.mrb[0].mxu0
        %v427 = vpop.f32.mrb[0].mxu0
        %v428 = vadd.f32 0.0, %v427
        %v429 = vpop.f32.mrb[0].mxu0
        %430 = vmatprep.mubr.bf16.mxu0 0
        %431 = vmatmul.mubr.bf16.gmra.mrb[0].mxu0 %v361
        %v432 = vpop.f32.mrb[0].mxu0
        %v433 = vadd.f32 0.0, %v432
        %v434 = vpop.f32.mrb[0].mxu0
        %v435 = vpop.f32.mrb[0].mxu0
        %v436 = vadd.f32 0.0, %v435
        %v437 = vpop.f32.mrb[0].mxu0
        %438 = vmatprep.mubr.bf16.mxu0 0
        %439 = vmatmul.mubr.bf16.gmra.mrb[0].mxu0 %v364
        %v440 = vpop.f32.mrb[0].mxu0
        %v441 = vadd.f32 0.0, %v440
        %v442 = vpop.f32.mrb[0].mxu0
        %v443 = vpop.f32.mrb[0].mxu0
        %v444 = vadd.f32 0.0, %v443
        %v445 = vpop.f32.mrb[0].mxu0
        %446 = vmatprep.mubr.bf16.mxu0 0
        %447 = vmatmul.mubr.bf16.gmra.mrb[0].mxu0 %v367
        %v448 = vpop.f32.mrb[0].mxu0
        %v449 = vadd.f32 0.0, %v448
        %v450 = vpop.f32.mrb[0].mxu0
        %v451 = vpop.f32.mrb[0].mxu0
        %v452 = vadd.f32 0.0, %v451
        %v453 = vpop.f32.mrb[0].mxu0
        %454 = vmatprep.mubr.bf16.mxu0 0
        %455 = vmatmul.mubr.bf16.gmra.mrb[0].mxu0 %v370
        %v456 = vpop.f32.mrb[0].mxu0
        %v457 = vadd.f32 0.0, %v456
        %v458 = vpop.f32.mrb[0].mxu0
        %v459 = vpop.f32.mrb[0].mxu0
        %v460 = vadd.f32 0.0, %v459
        %v461 = vpop.f32.mrb[0].mxu0
        %462 = vmatprep.mubr.bf16.mxu0 0
        %463 = vmatmul.mubr.bf16.gmra.mrb[0].mxu0 %v373
        %v464 = vpop.f32.mrb[0].mxu0
        %v465 = vadd.f32 0.0, %v464
        %v466 = vpop.f32.mrb[0].mxu0
        %v467 = vpop.f32.mrb[0].mxu0
        %v468 = vadd.f32 0.0, %v467
        %v469 = vpop.f32.mrb[0].mxu0
        %470 = vmatprep.mubr.bf16.mxu0 0
        %471 = vmatmul.mubr.bf16.gmra.mrb[0].mxu0 %v376
        %v472 = vpop.f32.mrb[0].mxu0
        %v473 = vadd.f32 0.0, %v472
        %v474 = vpop.f32.mrb[0].mxu0
        %v475 = vpop.f32.mrb[0].mxu0
        %v476 = vadd.f32 0.0, %v475
        %v477 = vpop.f32.mrb[0].mxu0
        %478 = vdwg.mxu0
        %s479 = smul.u32 %s27, 128
        %v480 = vlaneseq
        %v481 = vand.u32 %v480, 127
        %v482 = vstv %s479
        %v483 = vadd.s32 %v482, %v481
        %vm484 = vcmp.lt.s32.totalorder %v483, 64
        %v485 = vsel %vm484, %v417, -1e+30
        %v486 = vsel %vm484, %v420, -1e+30
        %v487 = vsel %vm484, %v425, -1e+30
        %v488 = vsel %vm484, %v428, -1e+30
        %v489 = vsel %vm484, %v433, -1e+30
        %v490 = vsel %vm484, %v436, -1e+30
        %v491 = vsel %vm484, %v441, -1e+30
        %v492 = vsel %vm484, %v444, -1e+30
        %v493 = vsel %vm484, %v449, -1e+30
        %v494 = vsel %vm484, %v452, -1e+30
        %v495 = vsel %vm484, %v457, -1e+30
        %v496 = vsel %vm484, %v460, -1e+30
        %v497 = vsel %vm484, %v465, -1e+30
        %v498 = vsel %vm484, %v468, -1e+30
        %v499 = vsel %vm484, %v473, -1e+30
        %v500 = vsel %vm484, %v476, -1e+30
        %v501 = vld [vmem:[#allocation2] sm:$0xff]
        %v502 = vld [vmem:[#allocation2 + $0x8] sm:$0xff]
        %v503 = vld [vmem:[#allocation2 + $0x10] sm:$0xff]
        %v504 = vld [vmem:[#allocation2 + $0x18] sm:$0xff]
        %v505 = vld [vmem:[#allocation2 + $0x20] sm:$0xff]
        %v506 = vld [vmem:[#allocation2 + $0x28] sm:$0xff]
        %v507 = vld [vmem:[#allocation2 + $0x30] sm:$0xff]
        %v508 = vld [vmem:[#allocation2 + $0x38] sm:$0xff]
        %v509 = vld [vmem:[#allocation2 + $0x40] sm:$0xff]
        %v510 = vld [vmem:[#allocation2 + $0x48] sm:$0xff]
        %v511 = vld [vmem:[#allocation2 + $0x50] sm:$0xff]
        %v512 = vld [vmem:[#allocation2 + $0x58] sm:$0xff]
        %v513 = vld [vmem:[#allocation2 + $0x60] sm:$0xff]
        %v514 = vld [vmem:[#allocation2 + $0x68] sm:$0xff]
        %v515 = vld [vmem:[#allocation2 + $0x70] sm:$0xff]
        %v516 = vld [vmem:[#allocation2 + $0x78] sm:$0xff]
        %517 = vmax.xlane.f32.xlu0 %v485
        %v518 = vpop.xlane.xlu0 %517
        %519 = vmax.xlane.f32.xlu0 %v486
        %v520 = vpop.xlane.xlu0 %519
        %521 = vmax.xlane.f32.xlu0 %v487
        %v522 = vpop.xlane.xlu0 %521
        %523 = vmax.xlane.f32.xlu0 %v488
        %v524 = vpop.xlane.xlu0 %523
        %525 = vmax.xlane.f32.xlu0 %v489
        %v526 = vpop.xlane.xlu0 %525
        %527 = vmax.xlane.f32.xlu0 %v490
        %v528 = vpop.xlane.xlu0 %527
        %529 = vmax.xlane.f32.xlu0 %v491
        %v530 = vpop.xlane.xlu0 %529
        %531 = vmax.xlane.f32.xlu0 %v492
        %v532 = vpop.xlane.xlu0 %531
        %533 = vmax.xlane.f32.xlu0 %v493
        %v534 = vpop.xlane.xlu0 %533
        %535 = vmax.xlane.f32.xlu0 %v494
        %v536 = vpop.xlane.xlu0 %535
        %537 = vmax.xlane.f32.xlu0 %v495
        %v538 = vpop.xlane.xlu0 %537
        %539 = vmax.xlane.f32.xlu0 %v496
        %v540 = vpop.xlane.xlu0 %539
        %541 = vmax.xlane.f32.xlu0 %v497
        %v542 = vpop.xlane.xlu0 %541
        %543 = vmax.xlane.f32.xlu0 %v498
        %v544 = vpop.xlane.xlu0 %543
        %545 = vmax.xlane.f32.xlu0 %v499
        %v546 = vpop.xlane.xlu0 %545
        %547 = vmax.xlane.f32.xlu0 %v500
        %v548 = vpop.xlane.xlu0 %547
        %v549 = vmax.f32 %v501, %v518
        %v550 = vmax.f32 %v502, %v520
        %v551 = vmax.f32 %v503, %v522
        %v552 = vmax.f32 %v504, %v524
        %v553 = vmax.f32 %v505, %v526
        %v554 = vmax.f32 %v506, %v528
        %v555 = vmax.f32 %v507, %v530
        %v556 = vmax.f32 %v508, %v532
        %v557 = vmax.f32 %v509, %v534
        %v558 = vmax.f32 %v510, %v536
        %v559 = vmax.f32 %v511, %v538
        %v560 = vmax.f32 %v512, %v540
        %v561 = vmax.f32 %v513, %v542
        %v562 = vmax.f32 %v514, %v544
        %v563 = vmax.f32 %v515, %v546
        %v564 = vmax.f32 %v516, %v548
        %v565 = vsub.f32 %v501, %v549
        %v566 = vsub.f32 %v502, %v550
        %v567 = vsub.f32 %v503, %v551
        %v568 = vsub.f32 %v504, %v552
        %v569 = vsub.f32 %v505, %v553
        %v570 = vsub.f32 %v506, %v554
        %v571 = vsub.f32 %v507, %v555
        %v572 = vsub.f32 %v508, %v556
        %v573 = vsub.f32 %v509, %v557
        %v574 = vsub.f32 %v510, %v558
        %v575 = vsub.f32 %v511, %v559
        %v576 = vsub.f32 %v512, %v560
        %v577 = vsub.f32 %v513, %v561
        %v578 = vsub.f32 %v514, %v562
        %v579 = vsub.f32 %v515, %v563
        %v580 = vsub.f32 %v516, %v564
        %v581 = vmul.f32 %v565, 1.442695
        %v582 = vpow.pop %v581
        %v583 = vmul.f32 %v566, 1.442695
        %v584 = vpow.pop %v583
        %v585 = vmul.f32 %v567, 1.442695
        %v586 = vpow.pop %v585
        %v587 = vmul.f32 %v568, 1.442695
        %v588 = vpow.pop %v587
        %v589 = vmul.f32 %v569, 1.442695
        %v590 = vpow.pop %v589
        %v591 = vmul.f32 %v570, 1.442695
        %v592 = vpow.pop %v591
        %v593 = vmul.f32 %v571, 1.442695
        %v594 = vpow.pop %v593
        %v595 = vmul.f32 %v572, 1.442695
        %v596 = vpow.pop %v595
        %v597 = vmul.f32 %v573, 1.442695
        %v598 = vpow.pop %v597
        %v599 = vmul.f32 %v574, 1.442695
        %v600 = vpow.pop %v599
        %v601 = vmul.f32 %v575, 1.442695
        %v602 = vpow.pop %v601
        %v603 = vmul.f32 %v576, 1.442695
        %v604 = vpow.pop %v603
        %v605 = vmul.f32 %v577, 1.442695
        %v606 = vpow.pop %v605
        %v607 = vmul.f32 %v578, 1.442695
        %v608 = vpow.pop %v607
        %v609 = vmul.f32 %v579, 1.442695
        %v610 = vpow.pop %v609
        %v611 = vmul.f32 %v580, 1.442695
        %v612 = vpow.pop %v611
        %614 = vset.pattern.permute.xlu0 0
        %615 = vperm.xlu0 %614, %v549
        %v616 = vpop.permute.xlu0 %615
        %619 = vset.pattern.permute.xlu0 0
        %620 = vperm.xlu0 %619, %v550
        %v621 = vpop.permute.xlu0 %620
        %624 = vset.pattern.permute.xlu0 0
        %625 = vperm.xlu0 %624, %v551
        %v626 = vpop.permute.xlu0 %625
        %629 = vset.pattern.permute.xlu0 0
        %630 = vperm.xlu0 %629, %v552
        %v631 = vpop.permute.xlu0 %630
        %634 = vset.pattern.permute.xlu0 0
        %635 = vperm.xlu0 %634, %v553
        %v636 = vpop.permute.xlu0 %635
        %639 = vset.pattern.permute.xlu0 0
        %640 = vperm.xlu0 %639, %v554
        %v641 = vpop.permute.xlu0 %640
        %644 = vset.pattern.permute.xlu0 0
        %645 = vperm.xlu0 %644, %v555
        %v646 = vpop.permute.xlu0 %645
        %649 = vset.pattern.permute.xlu0 0
        %650 = vperm.xlu0 %649, %v556
        %v651 = vpop.permute.xlu0 %650
        %654 = vset.pattern.permute.xlu0 0
        %655 = vperm.xlu0 %654, %v557
        %v656 = vpop.permute.xlu0 %655
        %659 = vset.pattern.permute.xlu0 0
        %660 = vperm.xlu0 %659, %v558
        %v661 = vpop.permute.xlu0 %660
        %664 = vset.pattern.permute.xlu0 0
        %665 = vperm.xlu0 %664, %v559
        %v666 = vpop.permute.xlu0 %665
        %669 = vset.pattern.permute.xlu0 0
        %670 = vperm.xlu0 %669, %v560
        %v671 = vpop.permute.xlu0 %670
        %674 = vset.pattern.permute.xlu0 0
        %675 = vperm.xlu0 %674, %v561
        %v676 = vpop.permute.xlu0 %675
        %679 = vset.pattern.permute.xlu0 0
        %680 = vperm.xlu0 %679, %v562
        %v681 = vpop.permute.xlu0 %680
        %684 = vset.pattern.permute.xlu0 0
        %685 = vperm.xlu0 %684, %v563
        %v686 = vpop.permute.xlu0 %685
        %689 = vset.pattern.permute.xlu0 0
        %690 = vperm.xlu0 %689, %v564
        %v691 = vpop.permute.xlu0 %690
        %v693 = vsub.f32 %v485, %v616
        %v694 = vsub.f32 %v486, %v621
        %v695 = vsub.f32 %v487, %v626
        %v696 = vsub.f32 %v488, %v631
        %v697 = vsub.f32 %v489, %v636
        %v698 = vsub.f32 %v490, %v641
        %v699 = vsub.f32 %v491, %v646
        %v700 = vsub.f32 %v492, %v651
        %v701 = vsub.f32 %v493, %v656
        %v702 = vsub.f32 %v494, %v661
        %v703 = vsub.f32 %v495, %v666
        %v704 = vsub.f32 %v496, %v671
        %v705 = vsub.f32 %v497, %v676
        %v706 = vsub.f32 %v498, %v681
        %v707 = vsub.f32 %v499, %v686
        %v708 = vsub.f32 %v500, %v691
        %v709 = vmul.f32 %v693, 1.442695
        %v710 = vpow.pop %v709
        %v711 = vmul.f32 %v694, 1.442695
        %v712 = vpow.pop %v711
        %v713 = vmul.f32 %v695, 1.442695
        %v714 = vpow.pop %v713
        %v715 = vmul.f32 %v696, 1.442695
        %v716 = vpow.pop %v715
        %v717 = vmul.f32 %v697, 1.442695
        %v718 = vpow.pop %v717
        %v719 = vmul.f32 %v698, 1.442695
        %v720 = vpow.pop %v719
        %v721 = vmul.f32 %v699, 1.442695
        %v722 = vpow.pop %v721
        %v723 = vmul.f32 %v700, 1.442695
        %v724 = vpow.pop %v723
        %v725 = vmul.f32 %v701, 1.442695
        %v726 = vpow.pop %v725
        %v727 = vmul.f32 %v702, 1.442695
        %v728 = vpow.pop %v727
        %v729 = vmul.f32 %v703, 1.442695
        %v730 = vpow.pop %v729
        %v731 = vmul.f32 %v704, 1.442695
        %v732 = vpow.pop %v731
        %v733 = vmul.f32 %v705, 1.442695
        %v734 = vpow.pop %v733
        %v735 = vmul.f32 %v706, 1.442695
        %v736 = vpow.pop %v735
        %v737 = vmul.f32 %v707, 1.442695
        %v738 = vpow.pop %v737
        %v739 = vmul.f32 %v708, 1.442695
        %v740 = vpow.pop %v739
        %v741 = vld [vmem:[#allocation3] sm:$0xff]
        %v742 = vld [vmem:[#allocation3 + $0x8] sm:$0xff]
        %v743 = vld [vmem:[#allocation3 + $0x10] sm:$0xff]
        %v744 = vld [vmem:[#allocation3 + $0x18] sm:$0xff]
        %v745 = vld [vmem:[#allocation3 + $0x20] sm:$0xff]
        %v746 = vld [vmem:[#allocation3 + $0x28] sm:$0xff]
        %v747 = vld [vmem:[#allocation3 + $0x30] sm:$0xff]
        %v748 = vld [vmem:[#allocation3 + $0x38] sm:$0xff]
        %v749 = vld [vmem:[#allocation3 + $0x40] sm:$0xff]
        %v750 = vld [vmem:[#allocation3 + $0x48] sm:$0xff]
        %v751 = vld [vmem:[#allocation3 + $0x50] sm:$0xff]
        %v752 = vld [vmem:[#allocation3 + $0x58] sm:$0xff]
        %v753 = vld [vmem:[#allocation3 + $0x60] sm:$0xff]
        %v754 = vld [vmem:[#allocation3 + $0x68] sm:$0xff]
        %v755 = vld [vmem:[#allocation3 + $0x70] sm:$0xff]
        %v756 = vld [vmem:[#allocation3 + $0x78] sm:$0xff]
        %v757 = vmul.f32 %v582, %v741
        %v758 = vmul.f32 %v584, %v742
        %v759 = vmul.f32 %v586, %v743
        %v760 = vmul.f32 %v588, %v744
        %v761 = vmul.f32 %v590, %v745
        %v762 = vmul.f32 %v592, %v746
        %v763 = vmul.f32 %v594, %v747
        %v764 = vmul.f32 %v596, %v748
        %v765 = vmul.f32 %v598, %v749
        %v766 = vmul.f32 %v600, %v750
        %v767 = vmul.f32 %v602, %v751
        %v768 = vmul.f32 %v604, %v752
        %v769 = vmul.f32 %v606, %v753
        %v770 = vmul.f32 %v608, %v754
        %v771 = vmul.f32 %v610, %v755
        %v772 = vmul.f32 %v612, %v756
        %773 = vadd.xlane.f32.xlu0 %v710
        %v774 = vpop.xlane.xlu0 %773
        %775 = vadd.xlane.f32.xlu0 %v712
        %v776 = vpop.xlane.xlu0 %775
        %777 = vadd.xlane.f32.xlu0 %v714
        %v778 = vpop.xlane.xlu0 %777
        %779 = vadd.xlane.f32.xlu0 %v716
        %v780 = vpop.xlane.xlu0 %779
        %781 = vadd.xlane.f32.xlu0 %v718
        %v782 = vpop.xlane.xlu0 %781
        %783 = vadd.xlane.f32.xlu0 %v720
        %v784 = vpop.xlane.xlu0 %783
        %785 = vadd.xlane.f32.xlu0 %v722
        %v786 = vpop.xlane.xlu0 %785
        %787 = vadd.xlane.f32.xlu0 %v724
        %v788 = vpop.xlane.xlu0 %787
        %789 = vadd.xlane.f32.xlu0 %v726
        %v790 = vpop.xlane.xlu0 %789
        %791 = vadd.xlane.f32.xlu0 %v728
        %v792 = vpop.xlane.xlu0 %791
        %793 = vadd.xlane.f32.xlu0 %v730
        %v794 = vpop.xlane.xlu0 %793
        %795 = vadd.xlane.f32.xlu0 %v732
        %v796 = vpop.xlane.xlu0 %795
        %797 = vadd.xlane.f32.xlu0 %v734
        %v798 = vpop.xlane.xlu0 %797
        %799 = vadd.xlane.f32.xlu0 %v736
        %v800 = vpop.xlane.xlu0 %799
        %801 = vadd.xlane.f32.xlu0 %v738
        %v802 = vpop.xlane.xlu0 %801
        %803 = vadd.xlane.f32.xlu0 %v740
        %v804 = vpop.xlane.xlu0 %803
        %v805 = vadd.f32 %v757, %v774
        %v806 = vadd.f32 %v758, %v776
        %v807 = vadd.f32 %v759, %v778
        %v808 = vadd.f32 %v760, %v780
        %v809 = vadd.f32 %v761, %v782
        %v810 = vadd.f32 %v762, %v784
        %v811 = vadd.f32 %v763, %v786
        %v812 = vadd.f32 %v764, %v788
        %v813 = vadd.f32 %v765, %v790
        %v814 = vadd.f32 %v766, %v792
        %v815 = vadd.f32 %v767, %v794
        %v816 = vadd.f32 %v768, %v796
        %v817 = vadd.f32 %v769, %v798
        %v818 = vadd.f32 %v770, %v800
        %v819 = vadd.f32 %v771, %v802
        %v820 = vadd.f32 %v772, %v804
        %vm821 = vcmask 7168
        %822 = vst.msk [vmem:[#allocation3] sm:$0xff] %vm821, %v805
        %823 = vst.msk [vmem:[#allocation3 + $0x8] sm:$0xff] %vm821, %v806
        %824 = vst.msk [vmem:[#allocation3 + $0x10] sm:$0xff] %vm821, %v807
        %825 = vst.msk [vmem:[#allocation3 + $0x18] sm:$0xff] %vm821, %v808
        %826 = vst.msk [vmem:[#allocation3 + $0x20] sm:$0xff] %vm821, %v809
        %827 = vst.msk [vmem:[#allocation3 + $0x28] sm:$0xff] %vm821, %v810
        %828 = vst.msk [vmem:[#allocation3 + $0x30] sm:$0xff] %vm821, %v811
        %829 = vst.msk [vmem:[#allocation3 + $0x38] sm:$0xff] %vm821, %v812
        %830 = vst.msk [vmem:[#allocation3 + $0x40] sm:$0xff] %vm821, %v813
        %831 = vst.msk [vmem:[#allocation3 + $0x48] sm:$0xff] %vm821, %v814
        %832 = vst.msk [vmem:[#allocation3 + $0x50] sm:$0xff] %vm821, %v815
        %833 = vst.msk [vmem:[#allocation3 + $0x58] sm:$0xff] %vm821, %v816
        %834 = vst.msk [vmem:[#allocation3 + $0x60] sm:$0xff] %vm821, %v817
        %835 = vst.msk [vmem:[#allocation3 + $0x68] sm:$0xff] %vm821, %v818
        %836 = vst.msk [vmem:[#allocation3 + $0x70] sm:$0xff] %vm821, %v819
        %837 = vst.msk [vmem:[#allocation3 + $0x78] sm:$0xff] %vm821, %v820
        %v838 = vld [vmem:[%s267] sm:$0x3]
        %839 = vmatprep.subr.mxu0 0.0
        %840 = vmatpush1.xpose.msra.mxu0 %v838
        %841 = vmatprep.subr.mxu0 0.0
        %842 = vmatpush1.xpose.msra.mxu0 0.0
        %843 = vmatprep.subr.mxu0 0.0
        %844 = vmatpush1.xpose.msra.mxu0 0.0
        %845 = vmatprep.subr.mxu0 0.0
        %846 = vmatpush1.xpose.msra.mxu0 0.0
        %847 = vmatprep.subr.mxu0 0.0
        %848 = vmatpush1.xpose.msra.mxu0 0.0
        %849 = vmatprep.subr.mxu0 0.0
        %850 = vmatpush1.xpose.msra.mxu0 0.0
        %851 = vmatprep.subr.mxu0 0.0
        %852 = vmatpush1.xpose.msra.mxu0 0.0
        %853 = vmatprep.subr.mxu0 0.0
        %854 = vmatpush1.xpose.msra.mxu0 0.0
        %855 = vmatprep.subr.mxu0 0.0
        %856 = vmatpush1.xpose.msra.mxu0 0.0
        %857 = vmatprep.subr.mxu0 0.0
        %858 = vmatpush1.xpose.msra.mxu0 0.0
        %859 = vmatprep.subr.mxu0 0.0
        %860 = vmatpush1.xpose.msra.mxu0 0.0
        %861 = vmatprep.subr.mxu0 0.0
        %862 = vmatpush1.xpose.msra.mxu0 0.0
        %863 = vmatprep.subr.mxu0 0.0
        %864 = vmatpush1.xpose.msra.mxu0 0.0
        %865 = vmatprep.subr.mxu0 0.0
        %866 = vmatpush1.xpose.msra.mxu0 0.0
        %867 = vmatprep.subr.mxu0 0.0
        %868 = vmatpush1.xpose.msra.mxu0 0.0
        %869 = vmatprep.subr.mxu0 0.0
        %870 = vmatpush1.xpose.msra.mxu0 0.0
        %871 = vmatprep.subr.mxu0 0.0
        %872 = vmatpush1.xpose.msra.mxu0 0.0
        %873 = vmatprep.subr.mxu0 0.0
        %874 = vmatpush1.xpose.msra.mxu0 0.0
        %875 = vmatprep.subr.mxu0 0.0
        %876 = vmatpush1.xpose.msra.mxu0 0.0
        %877 = vmatprep.subr.mxu0 0.0
        %878 = vmatpush1.xpose.msra.mxu0 0.0
        %879 = vmatprep.subr.mxu0 0.0
        %880 = vmatpush1.xpose.msra.mxu0 0.0
        %881 = vmatprep.subr.mxu0 0.0
        %882 = vmatpush1.xpose.msra.mxu0 0.0
        %883 = vmatprep.subr.mxu0 0.0
        %884 = vmatpush1.xpose.msra.mxu0 0.0
        %885 = vmatprep.subr.mxu0 0.0
        %886 = vmatpush1.xpose.msra.mxu0 0.0
        %887 = vmatprep.subr.mxu0 0.0
        %888 = vmatpush1.xpose.msra.mxu0 0.0
        %889 = vmatprep.subr.mxu0 0.0
        %890 = vmatpush1.xpose.msra.mxu0 0.0
        %891 = vmatprep.subr.mxu0 0.0
        %892 = vmatpush1.xpose.msra.mxu0 0.0
        %893 = vmatprep.subr.mxu0 0.0
        %894 = vmatpush1.xpose.msra.mxu0 0.0
        %895 = vmatprep.subr.mxu0 0.0
        %896 = vmatpush1.xpose.msra.mxu0 0.0
        %897 = vmatprep.subr.mxu0 0.0
        %898 = vmatpush1.xpose.msra.mxu0 0.0
        %899 = vmatprep.subr.mxu0 0.0
        %900 = vmatpush1.xpose.msra.mxu0 0.0
        %901 = vmatprep.subr.mxu0 0.0
        %902 = vmatpush1.xpose.msra.mxu0 0.0
        %903 = vmatprep.mubr.f32.mxu0 0.0
        %904 = vmatmul.mubr.f32.gmra.mrb[0].mxu0 %v710
        %v905 = vpop.f32.mrb[0].mxu0
        %v906 = vadd.f32 0.0, %v905
        %v907 = vpop.f32.mrb[0].mxu0
        %908 = vmatprep.mubr.f32.mxu0 0.0
        %909 = vmatmul.mubr.f32.gmra.mrb[0].mxu0 %v712
        %v910 = vpop.f32.mrb[0].mxu0
        %v911 = vadd.f32 0.0, %v910
        %v912 = vpop.f32.mrb[0].mxu0
        %913 = vmatprep.mubr.f32.mxu0 0.0
        %914 = vmatmul.mubr.f32.gmra.mrb[0].mxu0 %v714
        %v915 = vpop.f32.mrb[0].mxu0
        %v916 = vadd.f32 0.0, %v915
        %v917 = vpop.f32.mrb[0].mxu0
        %918 = vmatprep.mubr.f32.mxu0 0.0
        %919 = vmatmul.mubr.f32.gmra.mrb[0].mxu0 %v716
        %v920 = vpop.f32.mrb[0].mxu0
        %v921 = vadd.f32 0.0, %v920
        %v922 = vpop.f32.mrb[0].mxu0
        %923 = vmatprep.mubr.f32.mxu0 0.0
        %924 = vmatmul.mubr.f32.gmra.mrb[0].mxu0 %v718
        %v925 = vpop.f32.mrb[0].mxu0
        %v926 = vadd.f32 0.0, %v925
        %v927 = vpop.f32.mrb[0].mxu0
        %928 = vmatprep.mubr.f32.mxu0 0.0
        %929 = vmatmul.mubr.f32.gmra.mrb[0].mxu0 %v720
        %v930 = vpop.f32.mrb[0].mxu0
        %v931 = vadd.f32 0.0, %v930
        %v932 = vpop.f32.mrb[0].mxu0
        %933 = vmatprep.mubr.f32.mxu0 0.0
        %934 = vmatmul.mubr.f32.gmra.mrb[0].mxu0 %v722
        %v935 = vpop.f32.mrb[0].mxu0
        %v936 = vadd.f32 0.0, %v935
        %v937 = vpop.f32.mrb[0].mxu0
        %938 = vmatprep.mubr.f32.mxu0 0.0
        %939 = vmatmul.mubr.f32.gmra.mrb[0].mxu0 %v724
        %v940 = vpop.f32.mrb[0].mxu0
        %v941 = vadd.f32 0.0, %v940
        %v942 = vpop.f32.mrb[0].mxu0
        %943 = vmatprep.mubr.f32.mxu0 0.0
        %944 = vmatmul.mubr.f32.gmra.mrb[0].mxu0 %v726
        %v945 = vpop.f32.mrb[0].mxu0
        %v946 = vadd.f32 0.0, %v945
        %v947 = vpop.f32.mrb[0].mxu0
        %948 = vmatprep.mubr.f32.mxu0 0.0
        %949 = vmatmul.mubr.f32.gmra.mrb[0].mxu0 %v728
        %v950 = vpop.f32.mrb[0].mxu0
        %v951 = vadd.f32 0.0, %v950
        %v952 = vpop.f32.mrb[0].mxu0
        %953 = vmatprep.mubr.f32.mxu0 0.0
        %954 = vmatmul.mubr.f32.gmra.mrb[0].mxu0 %v730
        %v955 = vpop.f32.mrb[0].mxu0
        %v956 = vadd.f32 0.0, %v955
        %v957 = vpop.f32.mrb[0].mxu0
        %958 = vmatprep.mubr.f32.mxu0 0.0
        %959 = vmatmul.mubr.f32.gmra.mrb[0].mxu0 %v732
        %v960 = vpop.f32.mrb[0].mxu0
        %v961 = vadd.f32 0.0, %v960
        %v962 = vpop.f32.mrb[0].mxu0
        %963 = vmatprep.mubr.f32.mxu0 0.0
        %964 = vmatmul.mubr.f32.gmra.mrb[0].mxu0 %v734
        %v965 = vpop.f32.mrb[0].mxu0
        %v966 = vadd.f32 0.0, %v965
        %v967 = vpop.f32.mrb[0].mxu0
        %968 = vmatprep.mubr.f32.mxu0 0.0
        %969 = vmatmul.mubr.f32.gmra.mrb[0].mxu0 %v736
        %v970 = vpop.f32.mrb[0].mxu0
        %v971 = vadd.f32 0.0, %v970
        %v972 = vpop.f32.mrb[0].mxu0
        %973 = vmatprep.mubr.f32.mxu0 0.0
        %974 = vmatmul.mubr.f32.gmra.mrb[0].mxu0 %v738
        %v975 = vpop.f32.mrb[0].mxu0
        %v976 = vadd.f32 0.0, %v975
        %v977 = vpop.f32.mrb[0].mxu0
        %978 = vmatprep.mubr.f32.mxu0 0.0
        %979 = vmatmul.mubr.f32.gmra.mrb[0].mxu0 %v740
        %v980 = vpop.f32.mrb[0].mxu0
        %v981 = vadd.f32 0.0, %v980
        %v982 = vpop.f32.mrb[0].mxu0
        %983 = vdwg.mxu0
        %v984 = vld [vmem:[#allocation4] sm:$0xff]
        %v985 = vld [vmem:[#allocation4 + $0x8] sm:$0xff]
        %v986 = vld [vmem:[#allocation4 + $0x10] sm:$0xff]
        %v987 = vld [vmem:[#allocation4 + $0x18] sm:$0xff]
        %v988 = vld [vmem:[#allocation4 + $0x20] sm:$0xff]
        %v989 = vld [vmem:[#allocation4 + $0x28] sm:$0xff]
        %v990 = vld [vmem:[#allocation4 + $0x30] sm:$0xff]
        %v991 = vld [vmem:[#allocation4 + $0x38] sm:$0xff]
        %v992 = vld [vmem:[#allocation4 + $0x40] sm:$0xff]
        %v993 = vld [vmem:[#allocation4 + $0x48] sm:$0xff]
        %v994 = vld [vmem:[#allocation4 + $0x50] sm:$0xff]
        %v995 = vld [vmem:[#allocation4 + $0x58] sm:$0xff]
        %v996 = vld [vmem:[#allocation4 + $0x60] sm:$0xff]
        %v997 = vld [vmem:[#allocation4 + $0x68] sm:$0xff]
        %v998 = vld [vmem:[#allocation4 + $0x70] sm:$0xff]
        %v999 = vld [vmem:[#allocation4 + $0x78] sm:$0xff]
        %1001 = vset.pattern.permute.xlu0 0
        %1002 = vperm.xlu0 %1001, %v582
        %v1003 = vpop.permute.xlu0 %1002
        %1006 = vset.pattern.permute.xlu0 0
        %1007 = vperm.xlu0 %1006, %v584
        %v1008 = vpop.permute.xlu0 %1007
        %1011 = vset.pattern.permute.xlu0 0
        %1012 = vperm.xlu0 %1011, %v586
        %v1013 = vpop.permute.xlu0 %1012
        %1016 = vset.pattern.permute.xlu0 0
        %1017 = vperm.xlu0 %1016, %v588
        %v1018 = vpop.permute.xlu0 %1017
        %1021 = vset.pattern.permute.xlu0 0
        %1022 = vperm.xlu0 %1021, %v590
        %v1023 = vpop.permute.xlu0 %1022
        %1026 = vset.pattern.permute.xlu0 0
        %1027 = vperm.xlu0 %1026, %v592
        %v1028 = vpop.permute.xlu0 %1027
        %1031 = vset.pattern.permute.xlu0 0
        %1032 = vperm.xlu0 %1031, %v594
        %v1033 = vpop.permute.xlu0 %1032
        %1036 = vset.pattern.permute.xlu0 0
        %1037 = vperm.xlu0 %1036, %v596
        %v1038 = vpop.permute.xlu0 %1037
        %1041 = vset.pattern.permute.xlu0 0
        %1042 = vperm.xlu0 %1041, %v598
        %v1043 = vpop.permute.xlu0 %1042
        %1046 = vset.pattern.permute.xlu0 0
        %1047 = vperm.xlu0 %1046, %v600
        %v1048 = vpop.permute.xlu0 %1047
        %1051 = vset.pattern.permute.xlu0 0
        %1052 = vperm.xlu0 %1051, %v602
        %v1053 = vpop.permute.xlu0 %1052
        %1056 = vset.pattern.permute.xlu0 0
        %1057 = vperm.xlu0 %1056, %v604
        %v1058 = vpop.permute.xlu0 %1057
        %1061 = vset.pattern.permute.xlu0 0
        %1062 = vperm.xlu0 %1061, %v606
        %v1063 = vpop.permute.xlu0 %1062
        %1066 = vset.pattern.permute.xlu0 0
        %1067 = vperm.xlu0 %1066, %v608
        %v1068 = vpop.permute.xlu0 %1067
        %1071 = vset.pattern.permute.xlu0 0
        %1072 = vperm.xlu0 %1071, %v610
        %v1073 = vpop.permute.xlu0 %1072
        %1076 = vset.pattern.permute.xlu0 0
        %1077 = vperm.xlu0 %1076, %v612
        %v1078 = vpop.permute.xlu0 %1077
        %v1080 = vmul.f32 %v1003, %v984
        %v1081 = vmul.f32 %v1008, %v985
        %v1082 = vmul.f32 %v1013, %v986
        %v1083 = vmul.f32 %v1018, %v987
        %v1084 = vmul.f32 %v1023, %v988
        %v1085 = vmul.f32 %v1028, %v989
        %v1086 = vmul.f32 %v1033, %v990
        %v1087 = vmul.f32 %v1038, %v991
        %v1088 = vmul.f32 %v1043, %v992
        %v1089 = vmul.f32 %v1048, %v993
        %v1090 = vmul.f32 %v1053, %v994
        %v1091 = vmul.f32 %v1058, %v995
        %v1092 = vmul.f32 %v1063, %v996
        %v1093 = vmul.f32 %v1068, %v997
        %v1094 = vmul.f32 %v1073, %v998
        %v1095 = vmul.f32 %v1078, %v999
        %v1096 = vadd.f32 %v1080, %v906
        %v1097 = vadd.f32 %v1081, %v911
        %v1098 = vadd.f32 %v1082, %v916
        %v1099 = vadd.f32 %v1083, %v921
        %v1100 = vadd.f32 %v1084, %v926
        %v1101 = vadd.f32 %v1085, %v931
        %v1102 = vadd.f32 %v1086, %v936
        %v1103 = vadd.f32 %v1087, %v941
        %v1104 = vadd.f32 %v1088, %v946
        %v1105 = vadd.f32 %v1089, %v951
        %v1106 = vadd.f32 %v1090, %v956
        %v1107 = vadd.f32 %v1091, %v961
        %v1108 = vadd.f32 %v1092, %v966
        %v1109 = vadd.f32 %v1093, %v971
        %v1110 = vadd.f32 %v1094, %v976
        %v1111 = vadd.f32 %v1095, %v981
        %vm1112 = vcmask 15360
        %1113 = vst.msk [vmem:[#allocation4] sm:$0xff] %vm1112, %v1096
        %1114 = vst.msk [vmem:[#allocation4 + $0x8] sm:$0xff] %vm1112, %v1097
        %1115 = vst.msk [vmem:[#allocation4 + $0x10] sm:$0xff] %vm1112, %v1098
        %1116 = vst.msk [vmem:[#allocation4 + $0x18] sm:$0xff] %vm1112, %v1099
        %1117 = vst.msk [vmem:[#allocation4 + $0x20] sm:$0xff] %vm1112, %v1100
        %1118 = vst.msk [vmem:[#allocation4 + $0x28] sm:$0xff] %vm1112, %v1101
        %1119 = vst.msk [vmem:[#allocation4 + $0x30] sm:$0xff] %vm1112, %v1102
        %1120 = vst.msk [vmem:[#allocation4 + $0x38] sm:$0xff] %vm1112, %v1103
        %1121 = vst.msk [vmem:[#allocation4 + $0x40] sm:$0xff] %vm1112, %v1104
        %1122 = vst.msk [vmem:[#allocation4 + $0x48] sm:$0xff] %vm1112, %v1105
        %1123 = vst.msk [vmem:[#allocation4 + $0x50] sm:$0xff] %vm1112, %v1106
        %1124 = vst.msk [vmem:[#allocation4 + $0x58] sm:$0xff] %vm1112, %v1107
        %1125 = vst.msk [vmem:[#allocation4 + $0x60] sm:$0xff] %vm1112, %v1108
        %1126 = vst.msk [vmem:[#allocation4 + $0x68] sm:$0xff] %vm1112, %v1109
        %1127 = vst.msk [vmem:[#allocation4 + $0x70] sm:$0xff] %vm1112, %v1110
        %1128 = vst.msk [vmem:[#allocation4 + $0x78] sm:$0xff] %vm1112, %v1111
        %1129 = vst.msk [vmem:[#allocation2] sm:$0xff] %vm821, %v549
        %1130 = vst.msk [vmem:[#allocation2 + $0x8] sm:$0xff] %vm821, %v550
        %1131 = vst.msk [vmem:[#allocation2 + $0x10] sm:$0xff] %vm821, %v551
        %1132 = vst.msk [vmem:[#allocation2 + $0x18] sm:$0xff] %vm821, %v552
        %1133 = vst.msk [vmem:[#allocation2 + $0x20] sm:$0xff] %vm821, %v553
        %1134 = vst.msk [vmem:[#allocation2 + $0x28] sm:$0xff] %vm821, %v554
        %1135 = vst.msk [vmem:[#allocation2 + $0x30] sm:$0xff] %vm821, %v555
        %1136 = vst.msk [vmem:[#allocation2 + $0x38] sm:$0xff] %vm821, %v556
        %1137 = vst.msk [vmem:[#allocation2 + $0x40] sm:$0xff] %vm821, %v557
        %1138 = vst.msk [vmem:[#allocation2 + $0x48] sm:$0xff] %vm821, %v558
        %1139 = vst.msk [vmem:[#allocation2 + $0x50] sm:$0xff] %vm821, %v559
        %1140 = vst.msk [vmem:[#allocation2 + $0x58] sm:$0xff] %vm821, %v560
        %1141 = vst.msk [vmem:[#allocation2 + $0x60] sm:$0xff] %vm821, %v561
        %1142 = vst.msk [vmem:[#allocation2 + $0x68] sm:$0xff] %vm821, %v562
        %1143 = vst.msk [vmem:[#allocation2 + $0x70] sm:$0xff] %vm821, %v563
        %1144 = vst.msk [vmem:[#allocation2 + $0x78] sm:$0xff] %vm821, %v564
        // Predicated region
        $region45: #{tpu_custom_call.1} parent=31 // pred_check
          %p1145 = pneg %p280
        $region46: #{tpu_custom_call.1} parent=31 // pred_check_branch
          %1147 = sbr.rel (%p1145) target = $region48
        $region47: #{tpu_custom_call.1} parent=31 // pred_region
          %v1148 = vld [vmem:[#allocation4] sm:$0xff]
          %v1149 = vld [vmem:[#allocation4 + $0x8] sm:$0xff]
          %v1150 = vld [vmem:[#allocation4 + $0x10] sm:$0xff]
          %v1151 = vld [vmem:[#allocation4 + $0x18] sm:$0xff]
          %v1152 = vld [vmem:[#allocation4 + $0x20] sm:$0xff]
          %v1153 = vld [vmem:[#allocation4 + $0x28] sm:$0xff]
          %v1154 = vld [vmem:[#allocation4 + $0x30] sm:$0xff]
          %v1155 = vld [vmem:[#allocation4 + $0x38] sm:$0xff]
          %v1156 = vld [vmem:[#allocation4 + $0x40] sm:$0xff]
          %v1157 = vld [vmem:[#allocation4 + $0x48] sm:$0xff]
          %v1158 = vld [vmem:[#allocation4 + $0x50] sm:$0xff]
          %v1159 = vld [vmem:[#allocation4 + $0x58] sm:$0xff]
          %v1160 = vld [vmem:[#allocation4 + $0x60] sm:$0xff]
          %v1161 = vld [vmem:[#allocation4 + $0x68] sm:$0xff]
          %v1162 = vld [vmem:[#allocation4 + $0x70] sm:$0xff]
          %v1163 = vld [vmem:[#allocation4 + $0x78] sm:$0xff]
          %v1164 = vld [vmem:[#allocation3] sm:$0xff]
          %v1165 = vld [vmem:[#allocation3 + $0x8] sm:$0xff]
          %v1166 = vld [vmem:[#allocation3 + $0x10] sm:$0xff]
          %v1167 = vld [vmem:[#allocation3 + $0x18] sm:$0xff]
          %v1168 = vld [vmem:[#allocation3 + $0x20] sm:$0xff]
          %v1169 = vld [vmem:[#allocation3 + $0x28] sm:$0xff]
          %v1170 = vld [vmem:[#allocation3 + $0x30] sm:$0xff]
          %v1171 = vld [vmem:[#allocation3 + $0x38] sm:$0xff]
          %v1172 = vld [vmem:[#allocation3 + $0x40] sm:$0xff]
          %v1173 = vld [vmem:[#allocation3 + $0x48] sm:$0xff]
          %v1174 = vld [vmem:[#allocation3 + $0x50] sm:$0xff]
          %v1175 = vld [vmem:[#allocation3 + $0x58] sm:$0xff]
          %v1176 = vld [vmem:[#allocation3 + $0x60] sm:$0xff]
          %v1177 = vld [vmem:[#allocation3 + $0x68] sm:$0xff]
          %v1178 = vld [vmem:[#allocation3 + $0x70] sm:$0xff]
          %v1179 = vld [vmem:[#allocation3 + $0x78] sm:$0xff]
          %1181 = vset.pattern.permute.xlu0 0
          %1182 = vperm.xlu0 %1181, %v1164
          %v1183 = vpop.permute.xlu0 %1182
          %1186 = vset.pattern.permute.xlu0 0
          %1187 = vperm.xlu0 %1186, %v1165
          %v1188 = vpop.permute.xlu0 %1187
          %1191 = vset.pattern.permute.xlu0 0
          %1192 = vperm.xlu0 %1191, %v1166
          %v1193 = vpop.permute.xlu0 %1192
          %1196 = vset.pattern.permute.xlu0 0
          %1197 = vperm.xlu0 %1196, %v1167
          %v1198 = vpop.permute.xlu0 %1197
          %1201 = vset.pattern.permute.xlu0 0
          %1202 = vperm.xlu0 %1201, %v1168
          %v1203 = vpop.permute.xlu0 %1202
          %1206 = vset.pattern.permute.xlu0 0
          %1207 = vperm.xlu0 %1206, %v1169
          %v1208 = vpop.permute.xlu0 %1207
          %1211 = vset.pattern.permute.xlu0 0
          %1212 = vperm.xlu0 %1211, %v1170
          %v1213 = vpop.permute.xlu0 %1212
          %1216 = vset.pattern.permute.xlu0 0
          %1217 = vperm.xlu0 %1216, %v1171
          %v1218 = vpop.permute.xlu0 %1217
          %1221 = vset.pattern.permute.xlu0 0
          %1222 = vperm.xlu0 %1221, %v1172
          %v1223 = vpop.permute.xlu0 %1222
          %1226 = vset.pattern.permute.xlu0 0
          %1227 = vperm.xlu0 %1226, %v1173
          %v1228 = vpop.permute.xlu0 %1227
          %1231 = vset.pattern.permute.xlu0 0
          %1232 = vperm.xlu0 %1231, %v1174
          %v1233 = vpop.permute.xlu0 %1232
          %1236 = vset.pattern.permute.xlu0 0
          %1237 = vperm.xlu0 %1236, %v1175
          %v1238 = vpop.permute.xlu0 %1237
          %1241 = vset.pattern.permute.xlu0 0
          %1242 = vperm.xlu0 %1241, %v1176
          %v1243 = vpop.permute.xlu0 %1242
          %1246 = vset.pattern.permute.xlu0 0
          %1247 = vperm.xlu0 %1246, %v1177
          %v1248 = vpop.permute.xlu0 %1247
          %1251 = vset.pattern.permute.xlu0 0
          %1252 = vperm.xlu0 %1251, %v1178
          %v1253 = vpop.permute.xlu0 %1252
          %1256 = vset.pattern.permute.xlu0 0
          %1257 = vperm.xlu0 %1256, %v1179
          %v1258 = vpop.permute.xlu0 %1257
          %v1260 = vrcp.pop %v1183
          %v1261 = vmul.f32 %v1148, %v1260
          %v1262 = vrcp.pop %v1188
          %v1263 = vmul.f32 %v1149, %v1262
          %v1264 = vrcp.pop %v1193
          %v1265 = vmul.f32 %v1150, %v1264
          %v1266 = vrcp.pop %v1198
          %v1267 = vmul.f32 %v1151, %v1266
          %v1268 = vrcp.pop %v1203
          %v1269 = vmul.f32 %v1152, %v1268
          %v1270 = vrcp.pop %v1208
          %v1271 = vmul.f32 %v1153, %v1270
          %v1272 = vrcp.pop %v1213
          %v1273 = vmul.f32 %v1154, %v1272
          %v1274 = vrcp.pop %v1218
          %v1275 = vmul.f32 %v1155, %v1274
          %v1276 = vrcp.pop %v1223
          %v1277 = vmul.f32 %v1156, %v1276
          %v1278 = vrcp.pop %v1228
          %v1279 = vmul.f32 %v1157, %v1278
          %v1280 = vrcp.pop %v1233
          %v1281 = vmul.f32 %v1158, %v1280
          %v1282 = vrcp.pop %v1238
          %v1283 = vmul.f32 %v1159, %v1282
          %v1284 = vrcp.pop %v1243
          %v1285 = vmul.f32 %v1160, %v1284
          %v1286 = vrcp.pop %v1248
          %v1287 = vmul.f32 %v1161, %v1286
          %v1288 = vrcp.pop %v1253
          %v1289 = vmul.f32 %v1162, %v1288
          %v1290 = vrcp.pop %v1258
          %v1291 = vmul.f32 %v1163, %v1290
          %1292 = vst.msk [vmem:[%s276] sm:$0xff] %vm1112, %v1261
          %1293 = vst.msk [vmem:[%s276 + $0x8] sm:$0xff] %vm1112, %v1263
          %1294 = vst.msk [vmem:[%s276 + $0x10] sm:$0xff] %vm1112, %v1265
          %1295 = vst.msk [vmem:[%s276 + $0x18] sm:$0xff] %vm1112, %v1267
          %1296 = vst.msk [vmem:[%s276 + $0x20] sm:$0xff] %vm1112, %v1269
          %1297 = vst.msk [vmem:[%s276 + $0x28] sm:$0xff] %vm1112, %v1271
          %1298 = vst.msk [vmem:[%s276 + $0x30] sm:$0xff] %vm1112, %v1273
          %1299 = vst.msk [vmem:[%s276 + $0x38] sm:$0xff] %vm1112, %v1275
          %1300 = vst.msk [vmem:[%s276 + $0x40] sm:$0xff] %vm1112, %v1277
          %1301 = vst.msk [vmem:[%s276 + $0x48] sm:$0xff] %vm1112, %v1279
          %1302 = vst.msk [vmem:[%s276 + $0x50] sm:$0xff] %vm1112, %v1281
          %1303 = vst.msk [vmem:[%s276 + $0x58] sm:$0xff] %vm1112, %v1283
          %1304 = vst.msk [vmem:[%s276 + $0x60] sm:$0xff] %vm1112, %v1285
          %1305 = vst.msk [vmem:[%s276 + $0x68] sm:$0xff] %vm1112, %v1287
          %1306 = vst.msk [vmem:[%s276 + $0x70] sm:$0xff] %vm1112, %v1289
          %1307 = vst.msk [vmem:[%s276 + $0x78] sm:$0xff] %vm1112, %v1291
        $region48: #{tpu_custom_call.1} parent=31 // pred_fallthru
          _
        %s1308 = smul.u32 16, %s26
        %p1309 = scmp.lt.s32.totalorder %s25, 1
        %s1310 = scalar_select %p1309, %s25, 1
        %p1311 = scmp.lt.s32.totalorder %s1308, 15
        %s1312 = scalar_select %p1311, %s1308, 15
        %s1313 = smul.addr %s1310, 16
        %s1314 = sadd.s32 %s1312, %s1313
        %s1315 = smul.addr %s1314, 8
        %s1316 = scalar_lea.vmem %s3, %s1315
        // Predicated region
        $region49: #{tpu_custom_call.1} parent=31 // pred_check
          %p1317 = pneg %p141
        $region50: #{tpu_custom_call.1} parent=31 // pred_check_branch
          %1319 = sbr.rel (%p1317) target = $region52
        $region51: #{tpu_custom_call.1} parent=31 // pred_region
          %s1320 = smul.u32 16, %s26
        $region52: #{tpu_custom_call.1} parent=31 // pred_fallthru
          _
      $region32: #{tpu_custom_call.1} parent=5 // pred_fallthru
        _
      %p1321 = scmp.le.s32.totalorder 2, %s15
      // Predicated region
      $region53: #{tpu_custom_call.1} parent=5 // pred_check
        %p1322 = pneg %p1321
      $region54: #{tpu_custom_call.1} parent=5 // pred_check_branch
        %1324 = sbr.rel (%p1322) target = $region56
      $region55: #{tpu_custom_call.1} parent=5 // pred_region
        %s1325 = ssub.s32 %s15, 2
        // Predicated region
        $region57: #{tpu_custom_call.1} parent=55 // pred_check
          %p1326 = pneg %p147
        $region58: #{tpu_custom_call.1} parent=55 // pred_check_branch
          %1328 = sbr.rel (%p1326) target = $region60
        $region59: #{tpu_custom_call.1} parent=55 // pred_region
          %s1329 = smul.u32 16, %s29
          %p1330 = scmp.lt.s32.totalorder %s28, 1
          %s1331 = scalar_select %p1330, %s28, 1
          %p1332 = scmp.lt.s32.totalorder %s1329, 15
          %s1333 = scalar_select %p1332, %s1329, 15
          %s1334 = smul.addr %s1331, 16
          %s1335 = sadd.s32 %s1333, %s1334
          %s1336 = smul.addr %s1335, 8
          %s1337 = scalar_lea.vmem %s3, %s1336
        $region60: #{tpu_custom_call.1} parent=55 // pred_fallthru
          _
      $region56: #{tpu_custom_call.1} parent=5 // pred_fallthru
        _
    $region6: #{tpu_custom_call.1} parent=1 // loop_footer
      %s19 = sadd.s32 1, %s15
    $region7: #{tpu_custom_call.1} parent=1 // loop_footer_branch
      %14 = sbr.rel target = $region3
    $region8: #{tpu_custom_call.1} parent=1 // loop_exit
      _
    %1338 = vsyncpa [#allocation6], 1
    %s1339 = scalar_lea.sflag [#allocation6], 1
    %1340 = vsyncpa %s1339, 1
    %1341 = vsyncpa [#allocation8], 1
    %s1342 = scalar_lea.sflag [#allocation8], 1
    %1343 = vsyncpa %s1342, 1

</llo_original>
